<compile_context>
chip_gen: v7x
topology: tpu7x:2x2x1
jax: 0.10.0
libtpu: 0.0.40
codegen_flags: <defaults>
</compile_context>

<pallas_src>
import jax
import jax.numpy as jnp
import numpy as np
from jax.experimental import pallas as pl
from jax.experimental.pallas import tpu as pltpu

NEG_SLOPE = 0.01  # nn.LeakyReLU default negative_slope
LANE = 128
SUBLANE = 8


def _round_up(x, m):
    return ((x + m - 1) // m) * m


# ---------------------------------------------------------------------------
# Fused kernel (one grid step = block_b examples and their block_b*P paths):
# hts_encoder + lstm_trans(selected step) + per-example path attention + trans_fc.
# ---------------------------------------------------------------------------
def _fused_path_kernel(h_ref, t_ref, cpt_ref, rel_ref,
                       w_hh_ref, w_ht_ref, b_h_ref,
                       w_lc_ref, w_lr_ref, b_l_ref,
                       w_fh_ref, w_fl_ref, b_f_ref,
                       o_ref):
    leaky = lambda y: jnp.where(y > 0, y, NEG_SLOPE * y)
    f32 = jnp.float32

    bb = h_ref.shape[0]                 # examples in this block (static)
    pp = cpt_ref.shape[0] // bb         # paths per example (static)
    ldp = w_hh_ref.shape[1]             # lane-padded lstm_dim (128-multiple)

    # --- hts_encoder: Linear + LeakyReLU via split weights (no feature concat) ---
    hts = leaky(
        jnp.dot(h_ref[...], w_hh_ref[...], preferred_element_type=f32)
        + jnp.dot(t_ref[...], w_ht_ref[...], preferred_element_type=f32)
        + b_h_ref[...])                                            # (bb, ldp) f32

    # --- lstm_trans on the already-selected timestep rows only (no concat) ---
    blo = leaky(
        jnp.dot(cpt_ref[...], w_lc_ref[...], preferred_element_type=f32)
        + jnp.dot(rel_ref[...], w_lr_ref[...], preferred_element_type=f32)
        + b_l_ref[...])                                            # (bb*pp, ldp) f32

    # --- per-example path attention: exact (bb, pp) scores, no block-diag mask ---
    blo3 = blo.reshape(bb, pp, ldp)
    scores = jnp.sum(blo3 * hts.reshape(bb, 1, ldp), axis=2)       # (bb, pp)  VPU+XLU
    scores = scores - jnp.max(scores, axis=-1, keepdims=True)      # stable softmax
    e = jnp.exp(scores)                                            # EUP
    denom = jnp.sum(e, axis=-1, keepdims=True)
    # approx=True would push the divide fully onto the EUP; exact kept for tolerance.
    att = e * pl.reciprocal(denom, approx=False)                   # (bb, pp) f32
    latent = jnp.sum(blo3 * att.reshape(bb, pp, 1), axis=1)        # (bb, ldp) f32

    # --- trans_fc: Linear + LeakyReLU via split weights (no [hts|latent] concat) ---
    md = w_fh_ref.dtype                 # bf16 in production, f32 in the exact path
    y = (jnp.dot(hts.astype(md), w_fh_ref[...], preferred_element_type=f32)
         + jnp.dot(latent.astype(md), w_fl_ref[...], preferred_element_type=f32)
         + b_f_ref[...])
    o_ref[...] = leaky(y).astype(o_ref.dtype)                      # lane-dense store


# ---------------------------------------------------------------------------
# PathEncoder forward: tiny embedding gathers / index math in XLA glue,
# everything else in the gridded fused Pallas kernel.
# ---------------------------------------------------------------------------
def path_encoder_forward(params, concept_table, relation_table,
                         ht_ids, cpt_paths, rel_paths_raw, path_len,
                         paths_per_example, *, block_b=16,
                         matmul_dtype=jnp.bfloat16):
    B = ht_ids.shape[0]
    Ptot = cpt_paths.shape[0]
    P = paths_per_example
    assert Ptot == B * P
    CD = concept_table.shape[1]
    RD = relation_table.shape[1]
    LD = params["w_hts"].shape[1]
    out_dim = params["w_fc"].shape[1]
    LDp = _round_up(LD, LANE)        # lane-dense intermediate width
    OUTp = _round_up(out_dim, LANE)  # lane-dense output width (no vst.msk)

    # relation-id folding: i - 17 if i >= 17 else i   (reverse relations)
    rel_ids = jnp.where(rel_paths_raw >= 17, rel_paths_raw - 17, rel_paths_raw)

    # Select the (path_len - 1) timestep on the *indices* first, then gather only
    # those rows (lstm_trans is per-timestep, so select-then-linear is identical).
    # TODO(synk): zero-length paths (path_len == 0) would wrap to timestep T-1,
    #             same hazard as the torch code; no guard added.
    # TODO(synk): at scaled Ptot move these gathers in-kernel (scalar-prefetched
    #             indices + per-row make_async_copy from the HBM tables) so the
    #             row DMAs overlap the matmuls instead of a separate XLA gather.
    sel = path_len - 1
    row = jnp.arange(Ptot)
    cpt_sel = concept_table[cpt_paths[row, sel]]       # (Ptot, CD)
    rel_sel = relation_table[rel_ids[row, sel]]        # (Ptot, RD)
    h_emb = concept_table[ht_ids[:, 0]]                # (B, CD)
    t_emb = concept_table[ht_ids[:, 1]]                # (B, CD)

    # Pad the batch so the grid tiles evenly (block_b multiple of 8; default 16
    # so bf16 sublane packing stays aligned).  Padded rows are sliced off below.
    assert block_b % SUBLANE == 0
    Bp = _round_up(max(B, block_b), block_b)
    if Bp != B:
        h_emb = jnp.pad(h_emb, ((0, Bp - B), (0, 0)))
        t_emb = jnp.pad(t_emb, ((0, Bp - B), (0, 0)))
        cpt_sel = jnp.pad(cpt_sel, ((0, (Bp - B) * P), (0, 0)))
        rel_sel = jnp.pad(rel_sel, ((0, (Bp - B) * P), (0, 0)))

    # Split weights (sums-of-matmuls instead of feature concats) and zero-pad the
    # LD / out_dim columns up to 128 lanes.  Padded lanes stay exactly zero all the
    # way through (zero bias, zero weight rows/cols), so slicing at the end is exact.
    def pad2(w, r, c):
        return jnp.pad(w, ((0, r - w.shape[0]), (0, c - w.shape[1])))

    w_hts_h = pad2(params["w_hts"][:CD], CD, LDp)
    w_hts_t = pad2(params["w_hts"][CD:], CD, LDp)
    w_lt_c = pad2(params["w_lt"][:CD], CD, LDp)
    w_lt_r = pad2(params["w_lt"][CD:], RD, LDp)
    w_fc_ht = pad2(params["w_fc"][:LD], LDp, OUTp)
    w_fc_lat = pad2(params["w_fc"][LD:], LDp, OUTp)
    b_hts = jnp.pad(params["b_hts"], (0, LDp - LD)).reshape(1, LDp)
    b_lt = jnp.pad(params["b_lt"], (0, LDp - LD)).reshape(1, LDp)
    b_fc = jnp.pad(params["b_fc"], (0, OUTp - out_dim)).reshape(1, OUTp)

    # bf16 matmul operands; f32 accumulation (preferred_element_type) and f32
    # epilogue happen inside the kernel.  Biases stay f32 (added on the VPU).
    md = lambda a: a.astype(matmul_dtype)
    f32 = lambda a: a.astype(jnp.float32)
    args = [
        md(h_emb), md(t_emb), md(cpt_sel), md(rel_sel),
        md(w_hts_h), md(w_hts_t), f32(b_hts),
        md(w_lt_c), md(w_lt_r), f32(b_lt),
        md(w_fc_ht), md(w_fc_lat), f32(b_fc),
    ]

    # Weights/biases: constant index_map -> fetched once, VMEM-resident across steps.
    const = lambda shape: pl.BlockSpec(shape, lambda i: (0, 0))
    in_specs = [
        pl.BlockSpec((block_b, CD), lambda i: (i, 0)),        # h_emb
        pl.BlockSpec((block_b, CD), lambda i: (i, 0)),        # t_emb
        pl.BlockSpec((block_b * P, CD), lambda i: (i, 0)),    # cpt_sel
        pl.BlockSpec((block_b * P, RD), lambda i: (i, 0)),    # rel_sel
        const((CD, LDp)), const((CD, LDp)), const((1, LDp)),  # hts_encoder
        const((CD, LDp)), const((RD, LDp)), const((1, LDp)),  # lstm_trans
        const((LDp, OUTp)), const((LDp, OUTp)), const((1, OUTp)),  # trans_fc
    ]
    out_specs = pl.BlockSpec((block_b, OUTp), lambda i: (i, 0))

    out_padded = pl.pallas_call(
        _fused_path_kernel,
        out_shape=jax.ShapeDtypeStruct((Bp, OUTp), jnp.float32),
        grid=(Bp // block_b,),
        in_specs=in_specs,
        out_specs=out_specs,
        compiler_params=pltpu.CompilerParams(
            # Batch axis is embarrassingly parallel -> both v7x TensorCores.
            dimension_semantics=("parallel",),
            # Per-step working set here is tiny; at scaled block_b keep
            # 2x(per-step inputs + output) under this budget (v7x has 64 MiB VMEM).
            vmem_limit_bytes=32 * 1024 * 1024,
        ),
    )(*args)

    return out_padded[:B, :out_dim]


# ---------------------------------------------------------------------------
# pure-JAX reference for sanity checking (mirrors the torch forward literally:
# all timesteps through lstm_trans, then timestep selection, concats included).
# ---------------------------------------------------------------------------
def reference_forward(params, concept_table, relation_table,
                      ht_ids, cpt_paths, rel_paths_raw, path_len,
                      paths_per_example):
    leaky = lambda x: jnp.where(x > 0, x, NEG_SLOPE * x)
    rel_ids = jnp.where(rel_paths_raw >= 17, rel_paths_raw - 17, rel_paths_raw)
    path_embeds = jnp.concatenate(
        [concept_table[cpt_paths], relation_table[rel_ids]], -1)
    ht_vecs_raw = concept_table[ht_ids].reshape(ht_ids.shape[0], -1)
    hts = leaky(ht_vecs_raw @ params["w_hts"] + params["b_hts"])
    lstm_outs = leaky(path_embeds @ params["w_lt"] + params["b_lt"])
    blo = lstm_outs[jnp.arange(cpt_paths.shape[0]), path_len - 1]
    blo = blo.reshape(ht_ids.shape[0], paths_per_example, -1)
    att = jax.nn.softmax(jnp.einsum("bpl,bl->bp", blo, hts), axis=-1)
    latent = jnp.einsum("bpl,bp->bl", blo, att)
    z = jnp.concatenate([hts, latent], -1)
    return leaky(z @ params["w_fc"] + params["b_fc"])


# ---------------------------------------------------------------------------
if __name__ == "__main__":
    key = jax.random.PRNGKey(0)

    # config (small, consistent with the module's __init__)
    graph_hidden_dim = 16
    concept_dim = graph_hidden_dim        # required by the use_graph=False branch
    relation_dim = 16
    lstm_dim = 16
    bidirect = True
    LD = lstm_dim * 2 if bidirect else lstm_dim     # self.lstm_dim after doubling
    path_output_dim = 32

    B = 32                # batch / number of ht pairs (1 ht pair per example)
    P = 4                 # paths per ht pair (ht_path_num)
    T = 5                 # path length (code hard-wires 5-step paths)
    n_concepts = 40
    n_relation_types = 17  # relation table; raw rel ids in [0, 34) folded to [0, 17)

    ks = jax.random.split(key, 12)
    concept_table = jax.random.normal(ks[0], (n_concepts, concept_dim), jnp.float32)
    relation_table = jax.random.normal(ks[1], (n_relation_types, relation_dim), jnp.float32)

    params = {
        # hts_encoder: Linear(2*graph_hidden_dim -> LD)
        "w_hts": jax.random.normal(ks[2], (2 * graph_hidden_dim, LD), jnp.float32) * 0.1,
        "b_hts": jax.random.normal(ks[3], (LD,), jnp.float32) * 0.1,
        # lstm_trans: Linear(graph_hidden_dim + relation_dim -> lstm_dim*2 == LD)
        "w_lt": jax.random.normal(ks[4], (graph_hidden_dim + relation_dim, LD), jnp.float32) * 0.1,
        "b_lt": jax.random.normal(ks[5], (LD,), jnp.float32) * 0.1,
        # trans_fc: Linear(2*LD -> path_output_dim)
        "w_fc": jax.random.normal(ks[6], (2 * LD, path_output_dim), jnp.float32) * 0.1,
        "b_fc": jax.random.normal(ks[7], (path_output_dim,), jnp.float32) * 0.1,
    }

    ht_ids = jax.random.randint(ks[8], (B, 2), 0, n_concepts)
    cpt_paths = jax.random.randint(ks[9], (B * P, T), 0, n_concepts)
    rel_paths_raw = jax.random.randint(ks[10], (B * P, T), 0, 34)
    path_len = jax.random.randint(ks[11], (B * P,), 1, T + 1)

    ref = reference_forward(params, concept_table, relation_table,
                            ht_ids, cpt_paths, rel_paths_raw, path_len, P)

    # 1) exactness check: f32 matmul operands, tight tolerance
    out_f32 = path_encoder_forward(params, concept_table, relation_table,
                                   ht_ids, cpt_paths, rel_paths_raw, path_len, P,
                                   block_b=16, matmul_dtype=jnp.float32)
    out_f32 = jax.block_until_ready(out_f32)
    np.testing.assert_allclose(np.asarray(out_f32), np.asarray(ref),
                               rtol=1e-3, atol=1e-3)

    # 2) production setting: bf16 matmul operands, f32 accumulate + f32 epilogue
    out_bf16 = path_encoder_forward(params, concept_table, relation_table,
                                    ht_ids, cpt_paths, rel_paths_raw, path_len, P,
                                    block_b=16, matmul_dtype=jnp.bfloat16)
    out_bf16 = jax.block_until_ready(out_bf16)
    np.testing.assert_allclose(np.asarray(out_bf16), np.asarray(ref),
                               rtol=5e-2, atol=5e-2)

    assert out_f32.shape == (B, path_output_dim)
    assert out_bf16.shape == (B, path_output_dim)
    print("KERNEL_OK")
</pallas_src>

<mosaic_0001>
module attributes {stable_mosaic.version = 11 : i64} {
  func.func @_fused_path_kernel(%arg0: i32, %arg1: memref<16x16xf32, #tpu.memory_space<vmem>>, %arg2: memref<16x16xf32, #tpu.memory_space<vmem>>, %arg3: memref<64x16xf32, #tpu.memory_space<vmem>>, %arg4: memref<64x16xf32, #tpu.memory_space<vmem>>, %arg5: memref<16x128xf32, #tpu.memory_space<vmem>>, %arg6: memref<16x128xf32, #tpu.memory_space<vmem>>, %arg7: memref<1x128xf32, #tpu.memory_space<vmem>>, %arg8: memref<16x128xf32, #tpu.memory_space<vmem>>, %arg9: memref<16x128xf32, #tpu.memory_space<vmem>>, %arg10: memref<1x128xf32, #tpu.memory_space<vmem>>, %arg11: memref<128x128xf32, #tpu.memory_space<vmem>>, %arg12: memref<128x128xf32, #tpu.memory_space<vmem>>, %arg13: memref<1x128xf32, #tpu.memory_space<vmem>>, %arg14: memref<16x128xf32, #tpu.memory_space<vmem>>) attributes {dimension_semantics = [#tpu.dimension_semantics<parallel>], iteration_bounds = array<i64: 2>, scalar_prefetch = 0 : i64, scratch_operands = 0 : i64, tpu.core_type = #tpu.core_type<tc>, window_params = [{transform_indices = @transform_0, window_bounds = array<i64: 16, 16>}, {transform_indices = @transform_1, window_bounds = array<i64: 16, 16>}, {transform_indices = @transform_2, window_bounds = array<i64: 64, 16>}, {transform_indices = @transform_3, window_bounds = array<i64: 64, 16>}, {pipeline_mode = #tpu.pipeline_mode<synchronous>, transform_indices = @transform_4, window_bounds = array<i64: 16, 128>}, {pipeline_mode = #tpu.pipeline_mode<synchronous>, transform_indices = @transform_5, window_bounds = array<i64: 16, 128>}, {pipeline_mode = #tpu.pipeline_mode<synchronous>, transform_indices = @transform_6, window_bounds = array<i64: 1, 128>}, {pipeline_mode = #tpu.pipeline_mode<synchronous>, transform_indices = @transform_7, window_bounds = array<i64: 16, 128>}, {pipeline_mode = #tpu.pipeline_mode<synchronous>, transform_indices = @transform_8, window_bounds = array<i64: 16, 128>}, {pipeline_mode = #tpu.pipeline_mode<synchronous>, transform_indices = @transform_9, window_bounds = array<i64: 1, 128>}, {pipeline_mode = #tpu.pipeline_mode<synchronous>, transform_indices = @transform_10, window_bounds = array<i64: 128, 128>}, {pipeline_mode = #tpu.pipeline_mode<synchronous>, transform_indices = @transform_11, window_bounds = array<i64: 128, 128>}, {pipeline_mode = #tpu.pipeline_mode<synchronous>, transform_indices = @transform_12, window_bounds = array<i64: 1, 128>}, {transform_indices = @transform_13, window_bounds = array<i64: 16, 128>}]} {
    %c0 = arith.constant 0 : index
    %c0_0 = arith.constant 0 : index
    %0 = vector.load %arg1[%c0, %c0_0] : memref<16x16xf32, #tpu.memory_space<vmem>>, vector<16x16xf32>
    %c0_1 = arith.constant 0 : index
    %c0_2 = arith.constant 0 : index
    %1 = vector.load %arg5[%c0_1, %c0_2] : memref<16x128xf32, #tpu.memory_space<vmem>>, vector<16x128xf32>
    %cst = arith.constant dense<0.000000e+00> : vector<16x128xf32>
    %2 = tpu.matmul %0, %1, %cst {dimension_numbers = #tpu.dot_dimension_numbers<[1], [0], [0], [1], [0, 0, 1, 1], [], []>} : vector<16x16xf32>, vector<16x128xf32>, vector<16x128xf32> -> vector<16x128xf32>
    %c0_3 = arith.constant 0 : index
    %c0_4 = arith.constant 0 : index
    %3 = vector.load %arg2[%c0_3, %c0_4] : memref<16x16xf32, #tpu.memory_space<vmem>>, vector<16x16xf32>
    %c0_5 = arith.constant 0 : index
    %c0_6 = arith.constant 0 : index
    %4 = vector.load %arg6[%c0_5, %c0_6] : memref<16x128xf32, #tpu.memory_space<vmem>>, vector<16x128xf32>
    %cst_7 = arith.constant dense<0.000000e+00> : vector<16x128xf32>
    %5 = tpu.matmul %3, %4, %cst_7 {dimension_numbers = #tpu.dot_dimension_numbers<[1], [0], [0], [1], [0, 0, 1, 1], [], []>} : vector<16x16xf32>, vector<16x128xf32>, vector<16x128xf32> -> vector<16x128xf32>
    %6 = arith.addf %2, %5 : vector<16x128xf32>
    %c0_8 = arith.constant 0 : index
    %c0_9 = arith.constant 0 : index
    %7 = vector.load %arg7[%c0_8, %c0_9] : memref<1x128xf32, #tpu.memory_space<vmem>>, vector<1x128xf32>
    %8 = vector.broadcast %7 : vector<1x128xf32> to vector<16x128xf32>
    %9 = arith.addf %6, %8 : vector<16x128xf32>
    %cst_10 = arith.constant 0.000000e+00 : f32
    %10 = vector.broadcast %cst_10 : f32 to vector<16x128xf32>
    %11 = arith.cmpf ogt, %9, %10 : vector<16x128xf32>
    %cst_11 = arith.constant 0.00999999977 : f32
    %12 = vector.broadcast %cst_11 : f32 to vector<16x128xf32>
    %13 = arith.mulf %12, %9 : vector<16x128xf32>
    %14 = arith.select %11, %9, %13 : vector<16x128xi1>, vector<16x128xf32>
    %c0_12 = arith.constant 0 : index
    %c0_13 = arith.constant 0 : index
    %15 = vector.load %arg3[%c0_12, %c0_13] : memref<64x16xf32, #tpu.memory_space<vmem>>, vector<64x16xf32>
    %c0_14 = arith.constant 0 : index
    %c0_15 = arith.constant 0 : index
    %16 = vector.load %arg8[%c0_14, %c0_15] : memref<16x128xf32, #tpu.memory_space<vmem>>, vector<16x128xf32>
    %cst_16 = arith.constant dense<0.000000e+00> : vector<64x128xf32>
    %17 = tpu.matmul %15, %16, %cst_16 {dimension_numbers = #tpu.dot_dimension_numbers<[1], [0], [0], [1], [0, 0, 1, 1], [], []>} : vector<64x16xf32>, vector<16x128xf32>, vector<64x128xf32> -> vector<64x128xf32>
    %c0_17 = arith.constant 0 : index
    %c0_18 = arith.constant 0 : index
    %18 = vector.load %arg4[%c0_17, %c0_18] : memref<64x16xf32, #tpu.memory_space<vmem>>, vector<64x16xf32>
    %c0_19 = arith.constant 0 : index
    %c0_20 = arith.constant 0 : index
    %19 = vector.load %arg9[%c0_19, %c0_20] : memref<16x128xf32, #tpu.memory_space<vmem>>, vector<16x128xf32>
    %cst_21 = arith.constant dense<0.000000e+00> : vector<64x128xf32>
    %20 = tpu.matmul %18, %19, %cst_21 {dimension_numbers = #tpu.dot_dimension_numbers<[1], [0], [0], [1], [0, 0, 1, 1], [], []>} : vector<64x16xf32>, vector<16x128xf32>, vector<64x128xf32> -> vector<64x128xf32>
    %21 = arith.addf %17, %20 : vector<64x128xf32>
    %c0_22 = arith.constant 0 : index
    %c0_23 = arith.constant 0 : index
    %22 = vector.load %arg10[%c0_22, %c0_23] : memref<1x128xf32, #tpu.memory_space<vmem>>, vector<1x128xf32>
    %23 = vector.broadcast %22 : vector<1x128xf32> to vector<64x128xf32>
    %24 = arith.addf %21, %23 : vector<64x128xf32>
    %cst_24 = arith.constant 0.000000e+00 : f32
    %25 = vector.broadcast %cst_24 : f32 to vector<64x128xf32>
    %26 = arith.cmpf ogt, %24, %25 : vector<64x128xf32>
    %cst_25 = arith.constant 0.00999999977 : f32
    %27 = vector.broadcast %cst_25 : f32 to vector<64x128xf32>
    %28 = arith.mulf %27, %24 : vector<64x128xf32>
    %29 = arith.select %26, %24, %28 : vector<64x128xi1>, vector<64x128xf32>
    %30 = vector.shape_cast %29 : vector<64x128xf32> to vector<16x4x128xf32>
    %31 = vector.shape_cast %14 : vector<16x128xf32> to vector<16x1x128xf32>
    %32 = vector.broadcast %31 : vector<16x1x128xf32> to vector<16x4x128xf32>
    %33 = arith.mulf %30, %32 : vector<16x4x128xf32>
    %cst_26 = arith.constant dense<0.000000e+00> : vector<16x4xf32>
    %34 = vector.multi_reduction <add>, %33, %cst_26 [2] : vector<16x4x128xf32> to vector<16x4xf32>
    %cst_27 = arith.constant dense<0xFF800000> : vector<16xf32>
    %35 = vector.multi_reduction <maximumf>, %34, %cst_27 [1] : vector<16x4xf32> to vector<16xf32>
    %36 = vector.shape_cast %35 : vector<16xf32> to vector<16x1xf32>
    %37 = vector.broadcast %36 : vector<16x1xf32> to vector<16x4xf32>
    %38 = arith.subf %34, %37 : vector<16x4xf32>
    %39 = math.exp %38 : vector<16x4xf32>
    %cst_28 = arith.constant dense<0.000000e+00> : vector<16xf32>
    %40 = vector.multi_reduction <add>, %39, %cst_28 [1] : vector<16x4xf32> to vector<16xf32>
    %41 = vector.shape_cast %40 : vector<16xf32> to vector<16x1xf32>
    %42 = tpu.reciprocal %41 : vector<16x1xf32> -> vector<16x1xf32>
    %43 = vector.broadcast %42 : vector<16x1xf32> to vector<16x4xf32>
    %44 = arith.mulf %39, %43 : vector<16x4xf32>
    %45 = vector.shape_cast %44 : vector<16x4xf32> to vector<16x4x1xf32>
    %46 = vector.broadcast %45 : vector<16x4x1xf32> to vector<16x4x128xf32>
    %47 = arith.mulf %30, %46 : vector<16x4x128xf32>
    %cst_29 = arith.constant dense<0.000000e+00> : vector<16x128xf32>
    %48 = vector.multi_reduction <add>, %47, %cst_29 [1] : vector<16x4x128xf32> to vector<16x128xf32>
    %c0_30 = arith.constant 0 : index
    %c0_31 = arith.constant 0 : index
    %49 = vector.load %arg11[%c0_30, %c0_31] : memref<128x128xf32, #tpu.memory_space<vmem>>, vector<128x128xf32>
    %cst_32 = arith.constant dense<0.000000e+00> : vector<16x128xf32>
    %50 = tpu.matmul %14, %49, %cst_32 {dimension_numbers = #tpu.dot_dimension_numbers<[1], [0], [0], [1], [0, 0, 1, 1], [], []>} : vector<16x128xf32>, vector<128x128xf32>, vector<16x128xf32> -> vector<16x128xf32>
    %c0_33 = arith.constant 0 : index
    %c0_34 = arith.constant 0 : index
    %51 = vector.load %arg12[%c0_33, %c0_34] : memref<128x128xf32, #tpu.memory_space<vmem>>, vector<128x128xf32>
    %cst_35 = arith.constant dense<0.000000e+00> : vector<16x128xf32>
    %52 = tpu.matmul %48, %51, %cst_35 {dimension_numbers = #tpu.dot_dimension_numbers<[1], [0], [0], [1], [0, 0, 1, 1], [], []>} : vector<16x128xf32>, vector<128x128xf32>, vector<16x128xf32> -> vector<16x128xf32>
    %53 = arith.addf %50, %52 : vector<16x128xf32>
    %c0_36 = arith.constant 0 : index
    %c0_37 = arith.constant 0 : index
    %54 = vector.load %arg13[%c0_36, %c0_37] : memref<1x128xf32, #tpu.memory_space<vmem>>, vector<1x128xf32>
    %55 = vector.broadcast %54 : vector<1x128xf32> to vector<16x128xf32>
    %56 = arith.addf %53, %55 : vector<16x128xf32>
    %cst_38 = arith.constant 0.000000e+00 : f32
    %57 = vector.broadcast %cst_38 : f32 to vector<16x128xf32>
    %58 = arith.cmpf ogt, %56, %57 : vector<16x128xf32>
    %cst_39 = arith.constant 0.00999999977 : f32
    %59 = vector.broadcast %cst_39 : f32 to vector<16x128xf32>
    %60 = arith.mulf %59, %56 : vector<16x128xf32>
    %61 = arith.select %58, %56, %60 : vector<16x128xi1>, vector<16x128xf32>
    %c0_40 = arith.constant 0 : index
    %c0_41 = arith.constant 0 : index
    %62 = vector.load %arg14[%c0_40, %c0_41] : memref<16x128xf32, #tpu.memory_space<vmem>>, vector<16x128xf32>
    tpu.vector_store %arg14[%c0_40, %c0_41], %61 {strides = array<i32>} : memref<16x128xf32, #tpu.memory_space<vmem>>, vector<16x128xf32>,
    return
  }
  func.func @transform_0(%arg0: i32) -> (i32, i32) {
    %c0_i32 = arith.constant 0 : i32
    %c0_i32_0 = arith.constant 0 : i32
    return %arg0, %c0_i32 : i32, i32
  }
  func.func @transform_1(%arg0: i32) -> (i32, i32) {
    %c0_i32 = arith.constant 0 : i32
    %c0_i32_0 = arith.constant 0 : i32
    return %arg0, %c0_i32 : i32, i32
  }
  func.func @transform_2(%arg0: i32) -> (i32, i32) {
    %c0_i32 = arith.constant 0 : i32
    %c0_i32_0 = arith.constant 0 : i32
    return %arg0, %c0_i32 : i32, i32
  }
  func.func @transform_3(%arg0: i32) -> (i32, i32) {
    %c0_i32 = arith.constant 0 : i32
    %c0_i32_0 = arith.constant 0 : i32
    return %arg0, %c0_i32 : i32, i32
  }
  func.func @transform_4(%arg0: i32) -> (i32, i32) {
    %c0_i32 = arith.constant 0 : i32
    %c0_i32_0 = arith.constant 0 : i32
    %c0_i32_1 = arith.constant 0 : i32
    return %c0_i32, %c0_i32_0 : i32, i32
  }
  func.func @transform_5(%arg0: i32) -> (i32, i32) {
    %c0_i32 = arith.constant 0 : i32
    %c0_i32_0 = arith.constant 0 : i32
    %c0_i32_1 = arith.constant 0 : i32
    return %c0_i32, %c0_i32_0 : i32, i32
  }
  func.func @transform_6(%arg0: i32) -> (i32, i32) {
    %c0_i32 = arith.constant 0 : i32
    %c0_i32_0 = arith.constant 0 : i32
    %c0_i32_1 = arith.constant 0 : i32
    return %c0_i32, %c0_i32_0 : i32, i32
  }
  func.func @transform_7(%arg0: i32) -> (i32, i32) {
    %c0_i32 = arith.constant 0 : i32
    %c0_i32_0 = arith.constant 0 : i32
    %c0_i32_1 = arith.constant 0 : i32
    return %c0_i32, %c0_i32_0 : i32, i32
  }
  func.func @transform_8(%arg0: i32) -> (i32, i32) {
    %c0_i32 = arith.constant 0 : i32
    %c0_i32_0 = arith.constant 0 : i32
    %c0_i32_1 = arith.constant 0 : i32
    return %c0_i32, %c0_i32_0 : i32, i32
  }
  func.func @transform_9(%arg0: i32) -> (i32, i32) {
    %c0_i32 = arith.constant 0 : i32
    %c0_i32_0 = arith.constant 0 : i32
    %c0_i32_1 = arith.constant 0 : i32
    return %c0_i32, %c0_i32_0 : i32, i32
  }
  func.func @transform_10(%arg0: i32) -> (i32, i32) {
    %c0_i32 = arith.constant 0 : i32
    %c0_i32_0 = arith.constant 0 : i32
    %c0_i32_1 = arith.constant 0 : i32
    return %c0_i32, %c0_i32_0 : i32, i32
  }
  func.func @transform_11(%arg0: i32) -> (i32, i32) {
    %c0_i32 = arith.constant 0 : i32
    %c0_i32_0 = arith.constant 0 : i32
    %c0_i32_1 = arith.constant 0 : i32
    return %c0_i32, %c0_i32_0 : i32, i32
  }
  func.func @transform_12(%arg0: i32) -> (i32, i32) {
    %c0_i32 = arith.constant 0 : i32
    %c0_i32_0 = arith.constant 0 : i32
    %c0_i32_1 = arith.constant 0 : i32
    return %c0_i32, %c0_i32_0 : i32, i32
  }
  func.func @transform_13(%arg0: i32) -> (i32, i32) {
    %c0_i32 = arith.constant 0 : i32
    %c0_i32_0 = arith.constant 0 : i32
    return %arg0, %c0_i32 : i32, i32
  }
}

</mosaic_0001>

<llo_original>
// kernel: tpu_custom_call.1
$region0: #{tpu_custom_call.1}
  #allocation0 [shape = 'u32[]', space=smem, size = 0x4, offset = 0x4, fixed_abs, tag = 'smem constant byte address 0x4 - core index']
  #allocation1 [shape = 'u32[144,128]{1,0:T(1,128)}', space=vmem, size = 0x12000, scoped, tag = 'internal scratch']
  %s0 = inlined_call_operand.vmem [shape: f32[32,16], index: 0, kind: input, shape index: {}]
  %s1 = inlined_call_operand.vmem [shape: f32[32,16], index: 1, kind: input, shape index: {}]
  %s2 = inlined_call_operand.vmem [shape: f32[128,16], index: 2, kind: input, shape index: {}]
  %s3 = inlined_call_operand.vmem [shape: f32[128,16], index: 3, kind: input, shape index: {}]
  %s4 = inlined_call_operand.vmem [shape: f32[16,128], index: 4, kind: input, shape index: {}]
  %s5 = inlined_call_operand.vmem [shape: f32[16,128], index: 5, kind: input, shape index: {}]
  %s6 = inlined_call_operand.vmem [shape: f32[1,128], index: 6, kind: input, shape index: {}]
  %s7 = inlined_call_operand.vmem [shape: f32[16,128], index: 7, kind: input, shape index: {}]
  %s8 = inlined_call_operand.vmem [shape: f32[16,128], index: 8, kind: input, shape index: {}]
  %s9 = inlined_call_operand.vmem [shape: f32[1,128], index: 9, kind: input, shape index: {}]
  %s10 = inlined_call_operand.vmem [shape: f32[128,128], index: 10, kind: input, shape index: {}]
  %s11 = inlined_call_operand.vmem [shape: f32[128,128], index: 11, kind: input, shape index: {}]
  %s12 = inlined_call_operand.vmem [shape: f32[1,128], index: 12, kind: input, shape index: {}]
  %s13 = inlined_call_operand.hbm [shape: f32[32,128], index: 13, kind: output, shape index: {}]
  %s14 = sld [smem:[#allocation0]]
  $region85: #{tpu_custom_call.1} parent=0
    _
  %s16 = ssub.s32 1, %s14
  %s17 = scalar_select 0, %s16, %s14
  $region1: #{tpu_custom_call.1} parent=0
    #allocation2 [shape = 'u8[16384]{0}', space=vmem, size = 0x4000, scoped, tag = 'output window, operand 0']
    #allocation3 [shape = 's32[2]{0}', space=sflag, size = 0x8, scoped, tag = 'scoped memory for tpu_custom_call.1']
    %18 = vsyncpa [#allocation3], 0
    %s19 = scalar_lea.sflag [#allocation3], 1
    %20 = vsyncpa %s19, 0
    loop: start=0, step=1, limit=4
    $region2: #{tpu_custom_call.1} parent=1 // loop_pre_header
      _
    $region3: #{tpu_custom_call.1} parent=1 // loop_header
      %s22 = sphi 0, %s26
      %p23 = scmp.ge.s32.totalorder %s22, 4
      %s32 = sphi 0, %s34
      %s35 = sphi 0, %s32
      %s36 = sphi 0, %s35
      %s52 = sphi 0, %s36
      %s58 = sphi 0, %s60
      %s61 = sphi 0, %s58
      %s62 = sphi 0, %s61
      %s78 = sphi 0, %s62
      %s84 = sphi 0, %s86
      %s87 = sphi 0, %s84
      %s88 = sphi 0, %s87
      %s104 = sphi 0, %s88
      %s110 = sphi 0, %s112
      %s113 = sphi 0, %s110
      %s114 = sphi 0, %s113
      %s130 = sphi 0, %s114
      %s134 = sphi 0, %s134
      %s136 = sphi 0, %s134
      %s137 = sphi 0, %s136
      %s151 = sphi 0, %s137
      %s155 = sphi 0, %s155
      %s157 = sphi 0, %s155
      %s158 = sphi 0, %s157
      %s172 = sphi 0, %s158
      %s176 = sphi 0, %s176
      %s178 = sphi 0, %s176
      %s179 = sphi 0, %s178
      %s193 = sphi 0, %s179
      %s197 = sphi 0, %s197
      %s199 = sphi 0, %s197
      %s200 = sphi 0, %s199
      %s214 = sphi 0, %s200
      %s218 = sphi 0, %s218
      %s220 = sphi 0, %s218
      %s221 = sphi 0, %s220
      %s235 = sphi 0, %s221
      %s239 = sphi 0, %s239
      %s241 = sphi 0, %s239
      %s242 = sphi 0, %s241
      %s256 = sphi 0, %s242
      %s260 = sphi 0, %s260
      %s262 = sphi 0, %s260
      %s263 = sphi 0, %s262
      %s277 = sphi 0, %s263
      %s281 = sphi 0, %s281
      %s283 = sphi 0, %s281
      %s284 = sphi 0, %s283
      %s298 = sphi 0, %s284
      %s302 = sphi 0, %s302
      %s304 = sphi 0, %s302
      %s305 = sphi 0, %s304
      %s319 = sphi 0, %s305
      %s325 = sphi 0, %s327
      %s328 = sphi 0, %s325
      %s329 = sphi 0, %s328
      %s345 = sphi 0, %s329
    $region4: #{tpu_custom_call.1} parent=1 // loop_header_branch
      %25 = sbr.rel (%p23) target = $region8
    $region5: #{tpu_custom_call.1} parent=1 // loop_body
      %s27 = ssub.s32 %s22, 1
      %s28 = ssub.s32 %s22, 2
      %s29 = sadd.s32 %s22, 1
      %s30 = ssub.s32 %s22, %s29
      %p31 = scmp.eq.s32.totalorder %s30, 0
      %s33 = sadd.s32 %s32, 1
      %s34 = scalar_select %p31, %s32, %s33
      %p37 = pneg %p31
      %p38 = scmp.eq.s32.totalorder %s22, 1
      %p39 = por %p37, %p38
      %p40 = scmp.ne.s32.totalorder %s32, %s35
      %p41 = scmp.eq.s32.totalorder %s22, 0
      %p42 = por %p40, %p41
      %p43 = scmp.ne.s32.totalorder %s32, %s35
      %p44 = scmp.eq.s32.totalorder %s27, 1
      %p45 = por %p43, %p44
      %p46 = scmp.ne.s32.totalorder %s35, %s36
      %p47 = scmp.eq.s32.totalorder %s27, 0
      %p48 = por %p46, %p47
      %p49 = scmp.ne.s32.totalorder %s35, %s36
      %p50 = scmp.eq.s32.totalorder %s28, 1
      %p51 = por %p49, %p50
      %p53 = scmp.ne.s32.totalorder %s36, %s52
      %p54 = scmp.eq.s32.totalorder %s28, 0
      %p55 = por %p53, %p54
      %s56 = ssub.s32 %s22, %s29
      %p57 = scmp.eq.s32.totalorder %s56, 0
      %s59 = sadd.s32 %s58, 1
      %s60 = scalar_select %p57, %s58, %s59
      %p63 = pneg %p57
      %p64 = scmp.eq.s32.totalorder %s22, 1
      %p65 = por %p63, %p64
      %p66 = scmp.ne.s32.totalorder %s58, %s61
      %p67 = scmp.eq.s32.totalorder %s22, 0
      %p68 = por %p66, %p67
      %p69 = scmp.ne.s32.totalorder %s58, %s61
      %p70 = scmp.eq.s32.totalorder %s27, 1
      %p71 = por %p69, %p70
      %p72 = scmp.ne.s32.totalorder %s61, %s62
      %p73 = scmp.eq.s32.totalorder %s27, 0
      %p74 = por %p72, %p73
      %p75 = scmp.ne.s32.totalorder %s61, %s62
      %p76 = scmp.eq.s32.totalorder %s28, 1
      %p77 = por %p75, %p76
      %p79 = scmp.ne.s32.totalorder %s62, %s78
      %p80 = scmp.eq.s32.totalorder %s28, 0
      %p81 = por %p79, %p80
      %s82 = ssub.s32 %s22, %s29
      %p83 = scmp.eq.s32.totalorder %s82, 0
      %s85 = sadd.s32 %s84, 1
      %s86 = scalar_select %p83, %s84, %s85
      %p89 = pneg %p83
      %p90 = scmp.eq.s32.totalorder %s22, 1
      %p91 = por %p89, %p90
      %p92 = scmp.ne.s32.totalorder %s84, %s87
      %p93 = scmp.eq.s32.totalorder %s22, 0
      %p94 = por %p92, %p93
      %p95 = scmp.ne.s32.totalorder %s84, %s87
      %p96 = scmp.eq.s32.totalorder %s27, 1
      %p97 = por %p95, %p96
      %p98 = scmp.ne.s32.totalorder %s87, %s88
      %p99 = scmp.eq.s32.totalorder %s27, 0
      %p100 = por %p98, %p99
      %p101 = scmp.ne.s32.totalorder %s87, %s88
      %p102 = scmp.eq.s32.totalorder %s28, 1
      %p103 = por %p101, %p102
      %p105 = scmp.ne.s32.totalorder %s88, %s104
      %p106 = scmp.eq.s32.totalorder %s28, 0
      %p107 = por %p105, %p106
      %s108 = ssub.s32 %s22, %s29
      %p109 = scmp.eq.s32.totalorder %s108, 0
      %s111 = sadd.s32 %s110, 1
      %s112 = scalar_select %p109, %s110, %s111
      %p115 = pneg %p109
      %p116 = scmp.eq.s32.totalorder %s22, 1
      %p117 = por %p115, %p116
      %p118 = scmp.ne.s32.totalorder %s110, %s113
      %p119 = scmp.eq.s32.totalorder %s22, 0
      %p120 = por %p118, %p119
      %p121 = scmp.ne.s32.totalorder %s110, %s113
      %p122 = scmp.eq.s32.totalorder %s27, 1
      %p123 = por %p121, %p122
      %p124 = scmp.ne.s32.totalorder %s113, %s114
      %p125 = scmp.eq.s32.totalorder %s27, 0
      %p126 = por %p124, %p125
      %p127 = scmp.ne.s32.totalorder %s113, %s114
      %p128 = scmp.eq.s32.totalorder %s28, 1
      %p129 = por %p127, %p128
      %p131 = scmp.ne.s32.totalorder %s114, %s130
      %p132 = scmp.eq.s32.totalorder %s28, 0
      %p133 = por %p131, %p132
      %s135 = sadd.s32 %s134, 1
      %p138 = scmp.eq.s32.totalorder %s22, 1
      %p139 = scmp.ne.s32.totalorder %s134, %s136
      %p140 = scmp.eq.s32.totalorder %s22, 0
      %p141 = por %p139, %p140
      %p142 = scmp.ne.s32.totalorder %s134, %s136
      %p143 = scmp.eq.s32.totalorder %s27, 1
      %p144 = por %p142, %p143
      %p145 = scmp.ne.s32.totalorder %s136, %s137
      %p146 = scmp.eq.s32.totalorder %s27, 0
      %p147 = por %p145, %p146
      %p148 = scmp.ne.s32.totalorder %s136, %s137
      %p149 = scmp.eq.s32.totalorder %s28, 1
      %p150 = por %p148, %p149
      %p152 = scmp.ne.s32.totalorder %s137, %s151
      %p153 = scmp.eq.s32.totalorder %s28, 0
      %p154 = por %p152, %p153
      %s156 = sadd.s32 %s155, 1
      %p159 = scmp.eq.s32.totalorder %s22, 1
      %p160 = scmp.ne.s32.totalorder %s155, %s157
      %p161 = scmp.eq.s32.totalorder %s22, 0
      %p162 = por %p160, %p161
      %p163 = scmp.ne.s32.totalorder %s155, %s157
      %p164 = scmp.eq.s32.totalorder %s27, 1
      %p165 = por %p163, %p164
      %p166 = scmp.ne.s32.totalorder %s157, %s158
      %p167 = scmp.eq.s32.totalorder %s27, 0
      %p168 = por %p166, %p167
      %p169 = scmp.ne.s32.totalorder %s157, %s158
      %p170 = scmp.eq.s32.totalorder %s28, 1
      %p171 = por %p169, %p170
      %p173 = scmp.ne.s32.totalorder %s158, %s172
      %p174 = scmp.eq.s32.totalorder %s28, 0
      %p175 = por %p173, %p174
      %s177 = sadd.s32 %s176, 1
      %p180 = scmp.eq.s32.totalorder %s22, 1
      %p181 = scmp.ne.s32.totalorder %s176, %s178
      %p182 = scmp.eq.s32.totalorder %s22, 0
      %p183 = por %p181, %p182
      %p184 = scmp.ne.s32.totalorder %s176, %s178
      %p185 = scmp.eq.s32.totalorder %s27, 1
      %p186 = por %p184, %p185
      %p187 = scmp.ne.s32.totalorder %s178, %s179
      %p188 = scmp.eq.s32.totalorder %s27, 0
      %p189 = por %p187, %p188
      %p190 = scmp.ne.s32.totalorder %s178, %s179
      %p191 = scmp.eq.s32.totalorder %s28, 1
      %p192 = por %p190, %p191
      %p194 = scmp.ne.s32.totalorder %s179, %s193
      %p195 = scmp.eq.s32.totalorder %s28, 0
      %p196 = por %p194, %p195
      %s198 = sadd.s32 %s197, 1
      %p201 = scmp.eq.s32.totalorder %s22, 1
      %p202 = scmp.ne.s32.totalorder %s197, %s199
      %p203 = scmp.eq.s32.totalorder %s22, 0
      %p204 = por %p202, %p203
      %p205 = scmp.ne.s32.totalorder %s197, %s199
      %p206 = scmp.eq.s32.totalorder %s27, 1
      %p207 = por %p205, %p206
      %p208 = scmp.ne.s32.totalorder %s199, %s200
      %p209 = scmp.eq.s32.totalorder %s27, 0
      %p210 = por %p208, %p209
      %p211 = scmp.ne.s32.totalorder %s199, %s200
      %p212 = scmp.eq.s32.totalorder %s28, 1
      %p213 = por %p211, %p212
      %p215 = scmp.ne.s32.totalorder %s200, %s214
      %p216 = scmp.eq.s32.totalorder %s28, 0
      %p217 = por %p215, %p216
      %s219 = sadd.s32 %s218, 1
      %p222 = scmp.eq.s32.totalorder %s22, 1
      %p223 = scmp.ne.s32.totalorder %s218, %s220
      %p224 = scmp.eq.s32.totalorder %s22, 0
      %p225 = por %p223, %p224
      %p226 = scmp.ne.s32.totalorder %s218, %s220
      %p227 = scmp.eq.s32.totalorder %s27, 1
      %p228 = por %p226, %p227
      %p229 = scmp.ne.s32.totalorder %s220, %s221
      %p230 = scmp.eq.s32.totalorder %s27, 0
      %p231 = por %p229, %p230
      %p232 = scmp.ne.s32.totalorder %s220, %s221
      %p233 = scmp.eq.s32.totalorder %s28, 1
      %p234 = por %p232, %p233
      %p236 = scmp.ne.s32.totalorder %s221, %s235
      %p237 = scmp.eq.s32.totalorder %s28, 0
      %p238 = por %p236, %p237
      %s240 = sadd.s32 %s239, 1
      %p243 = scmp.eq.s32.totalorder %s22, 1
      %p244 = scmp.ne.s32.totalorder %s239, %s241
      %p245 = scmp.eq.s32.totalorder %s22, 0
      %p246 = por %p244, %p245
      %p247 = scmp.ne.s32.totalorder %s239, %s241
      %p248 = scmp.eq.s32.totalorder %s27, 1
      %p249 = por %p247, %p248
      %p250 = scmp.ne.s32.totalorder %s241, %s242
      %p251 = scmp.eq.s32.totalorder %s27, 0
      %p252 = por %p250, %p251
      %p253 = scmp.ne.s32.totalorder %s241, %s242
      %p254 = scmp.eq.s32.totalorder %s28, 1
      %p255 = por %p253, %p254
      %p257 = scmp.ne.s32.totalorder %s242, %s256
      %p258 = scmp.eq.s32.totalorder %s28, 0
      %p259 = por %p257, %p258
      %s261 = sadd.s32 %s260, 1
      %p264 = scmp.eq.s32.totalorder %s22, 1
      %p265 = scmp.ne.s32.totalorder %s260, %s262
      %p266 = scmp.eq.s32.totalorder %s22, 0
      %p267 = por %p265, %p266
      %p268 = scmp.ne.s32.totalorder %s260, %s262
      %p269 = scmp.eq.s32.totalorder %s27, 1
      %p270 = por %p268, %p269
      %p271 = scmp.ne.s32.totalorder %s262, %s263
      %p272 = scmp.eq.s32.totalorder %s27, 0
      %p273 = por %p271, %p272
      %p274 = scmp.ne.s32.totalorder %s262, %s263
      %p275 = scmp.eq.s32.totalorder %s28, 1
      %p276 = por %p274, %p275
      %p278 = scmp.ne.s32.totalorder %s263, %s277
      %p279 = scmp.eq.s32.totalorder %s28, 0
      %p280 = por %p278, %p279
      %s282 = sadd.s32 %s281, 1
      %p285 = scmp.eq.s32.totalorder %s22, 1
      %p286 = scmp.ne.s32.totalorder %s281, %s283
      %p287 = scmp.eq.s32.totalorder %s22, 0
      %p288 = por %p286, %p287
      %p289 = scmp.ne.s32.totalorder %s281, %s283
      %p290 = scmp.eq.s32.totalorder %s27, 1
      %p291 = por %p289, %p290
      %p292 = scmp.ne.s32.totalorder %s283, %s284
      %p293 = scmp.eq.s32.totalorder %s27, 0
      %p294 = por %p292, %p293
      %p295 = scmp.ne.s32.totalorder %s283, %s284
      %p296 = scmp.eq.s32.totalorder %s28, 1
      %p297 = por %p295, %p296
      %p299 = scmp.ne.s32.totalorder %s284, %s298
      %p300 = scmp.eq.s32.totalorder %s28, 0
      %p301 = por %p299, %p300
      %s303 = sadd.s32 %s302, 1
      %p306 = scmp.eq.s32.totalorder %s22, 1
      %p307 = scmp.ne.s32.totalorder %s302, %s304
      %p308 = scmp.eq.s32.totalorder %s22, 0
      %p309 = por %p307, %p308
      %p310 = scmp.ne.s32.totalorder %s302, %s304
      %p311 = scmp.eq.s32.totalorder %s27, 1
      %p312 = por %p310, %p311
      %p313 = scmp.ne.s32.totalorder %s304, %s305
      %p314 = scmp.eq.s32.totalorder %s27, 0
      %p315 = por %p313, %p314
      %p316 = scmp.ne.s32.totalorder %s304, %s305
      %p317 = scmp.eq.s32.totalorder %s28, 1
      %p318 = por %p316, %p317
      %p320 = scmp.ne.s32.totalorder %s305, %s319
      %p321 = scmp.eq.s32.totalorder %s28, 0
      %p322 = por %p320, %p321
      %s323 = ssub.s32 %s22, %s29
      %p324 = scmp.eq.s32.totalorder %s323, 0
      %s326 = sadd.s32 %s325, 1
      %s327 = scalar_select %p324, %s325, %s326
      %p330 = pneg %p324
      %p331 = scmp.eq.s32.totalorder %s22, 1
      %p332 = por %p330, %p331
      %p333 = scmp.ne.s32.totalorder %s325, %s328
      %p334 = scmp.eq.s32.totalorder %s22, 0
      %p335 = por %p333, %p334
      %p336 = scmp.ne.s32.totalorder %s325, %s328
      %p337 = scmp.eq.s32.totalorder %s27, 1
      %p338 = por %p336, %p337
      %p339 = scmp.ne.s32.totalorder %s328, %s329
      %p340 = scmp.eq.s32.totalorder %s27, 0
      %p341 = por %p339, %p340
      %p342 = scmp.ne.s32.totalorder %s328, %s329
      %p343 = scmp.eq.s32.totalorder %s28, 1
      %p344 = por %p342, %p343
      %p346 = scmp.ne.s32.totalorder %s329, %s345
      %p347 = scmp.eq.s32.totalorder %s28, 0
      %p348 = por %p346, %p347
      %p349 = scmp.le.s32.totalorder 1, %s22
      %p350 = scmp.lt.s32.totalorder %s22, 3
      %p351 = pnand %p349, %p350
      %p352 = pneg %p351
      // Predicated region
      $region9: #{tpu_custom_call.1} parent=5 // pred_check
        _
      $region10: #{tpu_custom_call.1} parent=5 // pred_check_branch
        %354 = sbr.rel (%p351) target = $region12
      $region11: #{tpu_custom_call.1} parent=5 // pred_region
        %s355 = ssub.s32 %s22, 1
        // Predicated region
        $region13: #{tpu_custom_call.1} parent=11 // pred_check
          %p356 = pneg %p147
        $region14: #{tpu_custom_call.1} parent=11 // pred_check_branch
          %358 = sbr.rel (%p356) target = $region16
        $region15: #{tpu_custom_call.1} parent=11 // pred_region
          _
        $region16: #{tpu_custom_call.1} parent=11 // pred_fallthru
          _
        // Predicated region
        $region17: #{tpu_custom_call.1} parent=11 // pred_check
          %p359 = pneg %p168
        $region18: #{tpu_custom_call.1} parent=11 // pred_check_branch
          %361 = sbr.rel (%p359) target = $region20
        $region19: #{tpu_custom_call.1} parent=11 // pred_region
          _
        $region20: #{tpu_custom_call.1} parent=11 // pred_fallthru
          _
        // Predicated region
        $region21: #{tpu_custom_call.1} parent=11 // pred_check
          %p362 = pneg %p189
        $region22: #{tpu_custom_call.1} parent=11 // pred_check_branch
          %364 = sbr.rel (%p362) target = $region24
        $region23: #{tpu_custom_call.1} parent=11 // pred_region
          _
        $region24: #{tpu_custom_call.1} parent=11 // pred_fallthru
          _
        // Predicated region
        $region25: #{tpu_custom_call.1} parent=11 // pred_check
          %p365 = pneg %p210
        $region26: #{tpu_custom_call.1} parent=11 // pred_check_branch
          %367 = sbr.rel (%p365) target = $region28
        $region27: #{tpu_custom_call.1} parent=11 // pred_region
          _
        $region28: #{tpu_custom_call.1} parent=11 // pred_fallthru
          _
        // Predicated region
        $region29: #{tpu_custom_call.1} parent=11 // pred_check
          %p368 = pneg %p231
        $region30: #{tpu_custom_call.1} parent=11 // pred_check_branch
          %370 = sbr.rel (%p368) target = $region32
        $region31: #{tpu_custom_call.1} parent=11 // pred_region
          _
        $region32: #{tpu_custom_call.1} parent=11 // pred_fallthru
          _
        // Predicated region
        $region33: #{tpu_custom_call.1} parent=11 // pred_check
          %p371 = pneg %p252
        $region34: #{tpu_custom_call.1} parent=11 // pred_check_branch
          %373 = sbr.rel (%p371) target = $region36
        $region35: #{tpu_custom_call.1} parent=11 // pred_region
          _
        $region36: #{tpu_custom_call.1} parent=11 // pred_fallthru
          _
        // Predicated region
        $region37: #{tpu_custom_call.1} parent=11 // pred_check
          %p374 = pneg %p273
        $region38: #{tpu_custom_call.1} parent=11 // pred_check_branch
          %376 = sbr.rel (%p374) target = $region40
        $region39: #{tpu_custom_call.1} parent=11 // pred_region
          _
        $region40: #{tpu_custom_call.1} parent=11 // pred_fallthru
          _
        // Predicated region
        $region41: #{tpu_custom_call.1} parent=11 // pred_check
          %p377 = pneg %p294
        $region42: #{tpu_custom_call.1} parent=11 // pred_check_branch
          %379 = sbr.rel (%p377) target = $region44
        $region43: #{tpu_custom_call.1} parent=11 // pred_region
          _
        $region44: #{tpu_custom_call.1} parent=11 // pred_fallthru
          _
        // Predicated region
        $region45: #{tpu_custom_call.1} parent=11 // pred_check
          %p380 = pneg %p315
        $region46: #{tpu_custom_call.1} parent=11 // pred_check_branch
          %382 = sbr.rel (%p380) target = $region48
        $region47: #{tpu_custom_call.1} parent=11 // pred_region
          _
        $region48: #{tpu_custom_call.1} parent=11 // pred_fallthru
          _
      $region12: #{tpu_custom_call.1} parent=5 // pred_fallthru
        _
      %p383 = scmp.lt.s32.totalorder %s22, 2
      // Predicated region
      $region49: #{tpu_custom_call.1} parent=5 // pred_check
        %p384 = pneg %p383
      $region50: #{tpu_custom_call.1} parent=5 // pred_check_branch
        %386 = sbr.rel (%p384) target = $region52
      $region51: #{tpu_custom_call.1} parent=5 // pred_region
        // Predicated region
        $region53: #{tpu_custom_call.1} parent=51 // pred_check
          %p387 = pneg %p42
        $region54: #{tpu_custom_call.1} parent=51 // pred_check_branch
          %389 = sbr.rel (%p387) target = $region56
        $region55: #{tpu_custom_call.1} parent=51 // pred_region
          %s390 = smul.u32 2, %s22
          %p391 = scmp.lt.s32.totalorder %s390, 3
          %s392 = scalar_select %p391, %s390, 3
          %s393 = smul.addr %s392, 8
          %s394 = scalar_lea.vmem %s0, %s393
          %s395 = smul.u32 2, %s22
        $region56: #{tpu_custom_call.1} parent=51 // pred_fallthru
          _
        // Predicated region
        $region57: #{tpu_custom_call.1} parent=51 // pred_check
          %p396 = pneg %p68
        $region58: #{tpu_custom_call.1} parent=51 // pred_check_branch
          %398 = sbr.rel (%p396) target = $region60
        $region59: #{tpu_custom_call.1} parent=51 // pred_region
          %s399 = smul.u32 2, %s22
          %p400 = scmp.lt.s32.totalorder %s399, 3
          %s401 = scalar_select %p400, %s399, 3
          %s402 = smul.addr %s401, 8
          %s403 = scalar_lea.vmem %s1, %s402
          %s404 = smul.u32 2, %s22
        $region60: #{tpu_custom_call.1} parent=51 // pred_fallthru
          _
        // Predicated region
        $region61: #{tpu_custom_call.1} parent=51 // pred_check
          %p405 = pneg %p94
        $region62: #{tpu_custom_call.1} parent=51 // pred_check_branch
          %407 = sbr.rel (%p405) target = $region64
        $region63: #{tpu_custom_call.1} parent=51 // pred_region
          %s408 = smul.u32 8, %s22
          %p409 = scmp.lt.s32.totalorder %s408, 15
          %s410 = scalar_select %p409, %s408, 15
          %s411 = smul.addr %s410, 8
          %s412 = scalar_lea.vmem %s2, %s411
          %s413 = smul.u32 8, %s22
        $region64: #{tpu_custom_call.1} parent=51 // pred_fallthru
          _
        // Predicated region
        $region65: #{tpu_custom_call.1} parent=51 // pred_check
          %p414 = pneg %p120
        $region66: #{tpu_custom_call.1} parent=51 // pred_check_branch
          %416 = sbr.rel (%p414) target = $region68
        $region67: #{tpu_custom_call.1} parent=51 // pred_region
          %s417 = smul.u32 8, %s22
          %p418 = scmp.lt.s32.totalorder %s417, 15
          %s419 = scalar_select %p418, %s417, 15
          %s420 = smul.addr %s419, 8
          %s421 = scalar_lea.vmem %s3, %s420
          %s422 = smul.u32 8, %s22
        $region68: #{tpu_custom_call.1} parent=51 // pred_fallthru
          _
      $region52: #{tpu_custom_call.1} parent=5 // pred_fallthru
        _
      %p423 = scmp.le.s32.totalorder 1, %s22
      %p424 = scmp.lt.s32.totalorder %s22, 3
      %p425 = pnand %p423, %p424
      %p426 = pneg %p425
      // Predicated region
      $region69: #{tpu_custom_call.1} parent=5 // pred_check
        _
      $region70: #{tpu_custom_call.1} parent=5 // pred_check_branch
        %428 = sbr.rel (%p425) target = $region72
      $region71: #{tpu_custom_call.1} parent=5 // pred_region
        %s429 = ssub.s32 %s22, 1
        %s430 = smul.u32 2, %s27
        %p431 = scmp.lt.s32.totalorder %s430, 3
        %s432 = scalar_select %p431, %s430, 3
        %s433 = smul.addr %s432, 8
        %s434 = scalar_lea.vmem %s0, %s433
        %p435 = pneg %p48
        %p436 = pneg %p45
        %s437 = smul.u32 2, %s27
        %p438 = scmp.lt.s32.totalorder %s437, 3
        %s439 = scalar_select %p438, %s437, 3
        %s440 = smul.addr %s439, 8
        %s441 = scalar_lea.vmem %s1, %s440
        %p442 = pneg %p74
        %p443 = pneg %p71
        %s444 = smul.u32 8, %s27
        %p445 = scmp.lt.s32.totalorder %s444, 15
        %s446 = scalar_select %p445, %s444, 15
        %s447 = smul.addr %s446, 8
        %s448 = scalar_lea.vmem %s2, %s447
        %p449 = pneg %p100
        %p450 = pneg %p97
        %s451 = smul.u32 8, %s27
        %p452 = scmp.lt.s32.totalorder %s451, 15
        %s453 = scalar_select %p452, %s451, 15
        %s454 = smul.addr %s453, 8
        %s455 = scalar_lea.vmem %s3, %s454
        %p456 = pneg %p126
        %p457 = pneg %p123
        %p458 = pneg %p147
        %p459 = pneg %p144
        %p460 = pneg %p168
        %p461 = pneg %p165
        %p462 = pneg %p189
        %p463 = pneg %p186
        %p464 = pneg %p210
        %p465 = pneg %p207
        %p466 = pneg %p231
        %p467 = pneg %p228
        %p468 = pneg %p252
        %p469 = pneg %p249
        %p470 = pneg %p273
        %p471 = pneg %p270
        %p472 = pneg %p294
        %p473 = pneg %p291
        %p474 = pneg %p315
        %p475 = pneg %p312
        %p476 = pneg %p341
        %p477 = pneg %p338
        %s478 = sand.u32 %s328, 1
        %s479 = scalar_lea.sflag [#allocation3], %s478
        %s480 = sand.u32 %s328, 1
        %s481 = smul.addr %s480, 16
        %s482 = scalar_lea.vmem [#allocation2], %s481
        %s483 = smul.u32 2, %s27
        %p484 = scmp.lt.s32.totalorder %s483, 3
        %s485 = scalar_select %p484, %s483, 3
        %s486 = smul.addr %s485, 8
        %s487 = scalar_lea.vmem %s0, %s486
        %s488 = smul.u32 2, %s27
        %s489 = smul.u32 2, %s27
        %p490 = scmp.lt.s32.totalorder %s489, 3
        %s491 = scalar_select %p490, %s489, 3
        %s492 = smul.addr %s491, 8
        %s493 = scalar_lea.vmem %s1, %s492
        %s494 = smul.u32 2, %s27
        %s495 = smul.u32 8, %s27
        %p496 = scmp.lt.s32.totalorder %s495, 15
        %s497 = scalar_select %p496, %s495, 15
        %s498 = smul.addr %s497, 8
        %s499 = scalar_lea.vmem %s2, %s498
        %s500 = smul.u32 8, %s27
        %s501 = smul.u32 8, %s27
        %p502 = scmp.lt.s32.totalorder %s501, 15
        %s503 = scalar_select %p502, %s501, 15
        %s504 = smul.addr %s503, 8
        %s505 = scalar_lea.vmem %s3, %s504
        %s506 = smul.u32 8, %s27
        %s507 = smul.u32 2, %s27
        %v508 = vld [vmem:[%s487] sm:$0xff]
        %v509 = vld [vmem:[%s487 + $0x8] sm:$0xff]
        %v510 = vld [vmem:[%s4] sm:$0xff]
        %v511 = vld [vmem:[%s4 + $0x8] sm:$0xff]
        %v512 = vld [vmem:[%s493] sm:$0xff]
        %v513 = vld [vmem:[%s493 + $0x8] sm:$0xff]
        %v514 = vld [vmem:[%s5] sm:$0xff]
        %v515 = vld [vmem:[%s5 + $0x8] sm:$0xff]
        %vm516 = vcmask 130048
        %v518 = vsel %vm516, %v512, 0
        %v521 = vsel %vm516, %v513, 0
        %523 = vmatprep.subr.mxu0 0.0
        %524 = vmatpush1.msra.mxu0 %v514
        %525 = vmatprep.subr.mxu0 0.0
        %526 = vmatpush1.msra.mxu0 %v515
        %527 = vmatprep.subr.mxu0 0.0
        %528 = vmatpush1.msra.mxu0 0.0
        %529 = vmatprep.subr.mxu0 0.0
        %530 = vmatpush1.msra.mxu0 0.0
        %531 = vmatprep.subr.mxu0 0.0
        %532 = vmatpush1.msra.mxu0 0.0
        %533 = vmatprep.subr.mxu0 0.0
        %534 = vmatpush1.msra.mxu0 0.0
        %535 = vmatprep.subr.mxu0 0.0
        %536 = vmatpush1.msra.mxu0 0.0
        %537 = vmatprep.subr.mxu0 0.0
        %538 = vmatpush1.msra.mxu0 0.0
        %539 = vmatprep.subr.mxu0 0.0
        %540 = vmatpush1.msra.mxu0 0.0
        %541 = vmatprep.subr.mxu0 0.0
        %542 = vmatpush1.msra.mxu0 0.0
        %543 = vmatprep.subr.mxu0 0.0
        %544 = vmatpush1.msra.mxu0 0.0
        %545 = vmatprep.subr.mxu0 0.0
        %546 = vmatpush1.msra.mxu0 0.0
        %547 = vmatprep.subr.mxu0 0.0
        %548 = vmatpush1.msra.mxu0 0.0
        %549 = vmatprep.subr.mxu0 0.0
        %550 = vmatpush1.msra.mxu0 0.0
        %551 = vmatprep.subr.mxu0 0.0
        %552 = vmatpush1.msra.mxu0 0.0
        %553 = vmatprep.subr.mxu0 0.0
        %554 = vmatpush1.msra.mxu0 0.0
        %555 = vmatprep.subr.mxu0 0.0
        %556 = vmatpush1.msra.mxu0 0.0
        %557 = vmatprep.subr.mxu0 0.0
        %558 = vmatpush1.msra.mxu0 0.0
        %559 = vmatprep.subr.mxu0 0.0
        %560 = vmatpush1.msra.mxu0 0.0
        %561 = vmatprep.subr.mxu0 0.0
        %562 = vmatpush1.msra.mxu0 0.0
        %563 = vmatprep.subr.mxu0 0.0
        %564 = vmatpush1.msra.mxu0 0.0
        %565 = vmatprep.subr.mxu0 0.0
        %566 = vmatpush1.msra.mxu0 0.0
        %567 = vmatprep.subr.mxu0 0.0
        %568 = vmatpush1.msra.mxu0 0.0
        %569 = vmatprep.subr.mxu0 0.0
        %570 = vmatpush1.msra.mxu0 0.0
        %571 = vmatprep.subr.mxu0 0.0
        %572 = vmatpush1.msra.mxu0 0.0
        %573 = vmatprep.subr.mxu0 0.0
        %574 = vmatpush1.msra.mxu0 0.0
        %575 = vmatprep.subr.mxu0 0.0
        %576 = vmatpush1.msra.mxu0 0.0
        %577 = vmatprep.subr.mxu0 0.0
        %578 = vmatpush1.msra.mxu0 0.0
        %579 = vmatprep.subr.mxu0 0.0
        %580 = vmatpush1.msra.mxu0 0.0
        %581 = vmatprep.subr.mxu0 0.0
        %582 = vmatpush1.msra.mxu0 0.0
        %583 = vmatprep.subr.mxu0 0.0
        %584 = vmatpush1.msra.mxu0 0.0
        %585 = vmatprep.subr.mxu0 0.0
        %586 = vmatpush1.msra.mxu0 0.0
        %587 = vmatprep.mubr.f32.mxu0 0.0
        %588 = vmatmul.mubr.f32.gmra.mrb[0].mxu0 %v518
        %v589 = vpop.f32.mrb[0].mxu0
        %v590 = vadd.f32 0.0, %v589
        %v591 = vpop.f32.mrb[0].mxu0
        %592 = vmatprep.mubr.f32.mxu0 0.0
        %593 = vmatmul.mubr.f32.gmra.mrb[0].mxu0 %v521
        %v594 = vpop.f32.mrb[0].mxu0
        %v595 = vadd.f32 0.0, %v594
        %v596 = vpop.f32.mrb[0].mxu0
        %597 = vdwg.mxu0
        %v599 = vsel %vm516, %v508, 0
        %v602 = vsel %vm516, %v509, 0
        %604 = vmatprep.subr.mxu0 0.0
        %605 = vmatpush1.msra.mxu0 %v510
        %606 = vmatprep.subr.mxu0 0.0
        %607 = vmatpush1.msra.mxu0 %v511
        %608 = vmatprep.subr.mxu0 0.0
        %609 = vmatpush1.msra.mxu0 0.0
        %610 = vmatprep.subr.mxu0 0.0
        %611 = vmatpush1.msra.mxu0 0.0
        %612 = vmatprep.subr.mxu0 0.0
        %613 = vmatpush1.msra.mxu0 0.0
        %614 = vmatprep.subr.mxu0 0.0
        %615 = vmatpush1.msra.mxu0 0.0
        %616 = vmatprep.subr.mxu0 0.0
        %617 = vmatpush1.msra.mxu0 0.0
        %618 = vmatprep.subr.mxu0 0.0
        %619 = vmatpush1.msra.mxu0 0.0
        %620 = vmatprep.subr.mxu0 0.0
        %621 = vmatpush1.msra.mxu0 0.0
        %622 = vmatprep.subr.mxu0 0.0
        %623 = vmatpush1.msra.mxu0 0.0
        %624 = vmatprep.subr.mxu0 0.0
        %625 = vmatpush1.msra.mxu0 0.0
        %626 = vmatprep.subr.mxu0 0.0
        %627 = vmatpush1.msra.mxu0 0.0
        %628 = vmatprep.subr.mxu0 0.0
        %629 = vmatpush1.msra.mxu0 0.0
        %630 = vmatprep.subr.mxu0 0.0
        %631 = vmatpush1.msra.mxu0 0.0
        %632 = vmatprep.subr.mxu0 0.0
        %633 = vmatpush1.msra.mxu0 0.0
        %634 = vmatprep.subr.mxu0 0.0
        %635 = vmatpush1.msra.mxu0 0.0
        %636 = vmatprep.subr.mxu0 0.0
        %637 = vmatpush1.msra.mxu0 0.0
        %638 = vmatprep.subr.mxu0 0.0
        %639 = vmatpush1.msra.mxu0 0.0
        %640 = vmatprep.subr.mxu0 0.0
        %641 = vmatpush1.msra.mxu0 0.0
        %642 = vmatprep.subr.mxu0 0.0
        %643 = vmatpush1.msra.mxu0 0.0
        %644 = vmatprep.subr.mxu0 0.0
        %645 = vmatpush1.msra.mxu0 0.0
        %646 = vmatprep.subr.mxu0 0.0
        %647 = vmatpush1.msra.mxu0 0.0
        %648 = vmatprep.subr.mxu0 0.0
        %649 = vmatpush1.msra.mxu0 0.0
        %650 = vmatprep.subr.mxu0 0.0
        %651 = vmatpush1.msra.mxu0 0.0
        %652 = vmatprep.subr.mxu0 0.0
        %653 = vmatpush1.msra.mxu0 0.0
        %654 = vmatprep.subr.mxu0 0.0
        %655 = vmatpush1.msra.mxu0 0.0
        %656 = vmatprep.subr.mxu0 0.0
        %657 = vmatpush1.msra.mxu0 0.0
        %658 = vmatprep.subr.mxu0 0.0
        %659 = vmatpush1.msra.mxu0 0.0
        %660 = vmatprep.subr.mxu0 0.0
        %661 = vmatpush1.msra.mxu0 0.0
        %662 = vmatprep.subr.mxu0 0.0
        %663 = vmatpush1.msra.mxu0 0.0
        %664 = vmatprep.subr.mxu0 0.0
        %665 = vmatpush1.msra.mxu0 0.0
        %666 = vmatprep.subr.mxu0 0.0
        %667 = vmatpush1.msra.mxu0 0.0
        %668 = vmatprep.mubr.f32.mxu0 0.0
        %669 = vmatmul.mubr.f32.gmra.mrb[0].mxu0 %v599
        %v670 = vpop.f32.mrb[0].mxu0
        %v671 = vadd.f32 %v590, %v670
        %v672 = vpop.f32.mrb[0].mxu0
        %673 = vmatprep.mubr.f32.mxu0 0.0
        %674 = vmatmul.mubr.f32.gmra.mrb[0].mxu0 %v602
        %v675 = vpop.f32.mrb[0].mxu0
        %v676 = vadd.f32 %v595, %v675
        %v677 = vpop.f32.mrb[0].mxu0
        %678 = vdwg.mxu0
        %v679 = vld [vmem:[%s6] sm:$0x1]
        %v681 = vlaneseq
        %v682 = vshrl.u32 %v681, 7
        %v683 = vsub.s32 0, %v682
        %v684 = vrot.slane %v679, %v683
        %v686 = vadd.f32 %v671, %v684
        %v687 = vadd.f32 %v676, %v684
        %vm688 = vcmp.gt.f32.partialorder %v686, 0.0
        %vm689 = vcmp.gt.f32.partialorder %v687, 0.0
        %v690 = vmul.f32 %v686, 0.01
        %v691 = vmul.f32 %v687, 0.01
        %v692 = vsel %vm688, %v686, %v690
        %v693 = vsel %vm689, %v687, %v691
        %v694 = vld [vmem:[%s499] sm:$0xff]
        %v695 = vld [vmem:[%s499 + $0x8] sm:$0xff]
        %v696 = vld [vmem:[%s499 + $0x10] sm:$0xff]
        %v697 = vld [vmem:[%s499 + $0x18] sm:$0xff]
        %v698 = vld [vmem:[%s499 + $0x20] sm:$0xff]
        %v699 = vld [vmem:[%s499 + $0x28] sm:$0xff]
        %v700 = vld [vmem:[%s499 + $0x30] sm:$0xff]
        %v701 = vld [vmem:[%s499 + $0x38] sm:$0xff]
        %v702 = vld [vmem:[%s7] sm:$0xff]
        %v703 = vld [vmem:[%s7 + $0x8] sm:$0xff]
        %v704 = vld [vmem:[%s505] sm:$0xff]
        %v705 = vld [vmem:[%s505 + $0x8] sm:$0xff]
        %v706 = vld [vmem:[%s505 + $0x10] sm:$0xff]
        %v707 = vld [vmem:[%s505 + $0x18] sm:$0xff]
        %v708 = vld [vmem:[%s505 + $0x20] sm:$0xff]
        %v709 = vld [vmem:[%s505 + $0x28] sm:$0xff]
        %v710 = vld [vmem:[%s505 + $0x30] sm:$0xff]
        %v711 = vld [vmem:[%s505 + $0x38] sm:$0xff]
        %v712 = vld [vmem:[%s8] sm:$0xff]
        %v713 = vld [vmem:[%s8 + $0x8] sm:$0xff]
        %v715 = vsel %vm516, %v704, 0
        %v718 = vsel %vm516, %v705, 0
        %v721 = vsel %vm516, %v706, 0
        %v724 = vsel %vm516, %v707, 0
        %v727 = vsel %vm516, %v708, 0
        %v730 = vsel %vm516, %v709, 0
        %v733 = vsel %vm516, %v710, 0
        %v736 = vsel %vm516, %v711, 0
        %738 = vmatprep.subr.mxu0 0.0
        %739 = vmatpush1.msra.mxu0 %v712
        %740 = vmatprep.subr.mxu0 0.0
        %741 = vmatpush1.msra.mxu0 %v713
        %742 = vmatprep.subr.mxu0 0.0
        %743 = vmatpush1.msra.mxu0 0.0
        %744 = vmatprep.subr.mxu0 0.0
        %745 = vmatpush1.msra.mxu0 0.0
        %746 = vmatprep.subr.mxu0 0.0
        %747 = vmatpush1.msra.mxu0 0.0
        %748 = vmatprep.subr.mxu0 0.0
        %749 = vmatpush1.msra.mxu0 0.0
        %750 = vmatprep.subr.mxu0 0.0
        %751 = vmatpush1.msra.mxu0 0.0
        %752 = vmatprep.subr.mxu0 0.0
        %753 = vmatpush1.msra.mxu0 0.0
        %754 = vmatprep.subr.mxu0 0.0
        %755 = vmatpush1.msra.mxu0 0.0
        %756 = vmatprep.subr.mxu0 0.0
        %757 = vmatpush1.msra.mxu0 0.0
        %758 = vmatprep.subr.mxu0 0.0
        %759 = vmatpush1.msra.mxu0 0.0
        %760 = vmatprep.subr.mxu0 0.0
        %761 = vmatpush1.msra.mxu0 0.0
        %762 = vmatprep.subr.mxu0 0.0
        %763 = vmatpush1.msra.mxu0 0.0
        %764 = vmatprep.subr.mxu0 0.0
        %765 = vmatpush1.msra.mxu0 0.0
        %766 = vmatprep.subr.mxu0 0.0
        %767 = vmatpush1.msra.mxu0 0.0
        %768 = vmatprep.subr.mxu0 0.0
        %769 = vmatpush1.msra.mxu0 0.0
        %770 = vmatprep.subr.mxu0 0.0
        %771 = vmatpush1.msra.mxu0 0.0
        %772 = vmatprep.subr.mxu0 0.0
        %773 = vmatpush1.msra.mxu0 0.0
        %774 = vmatprep.subr.mxu0 0.0
        %775 = vmatpush1.msra.mxu0 0.0
        %776 = vmatprep.subr.mxu0 0.0
        %777 = vmatpush1.msra.mxu0 0.0
        %778 = vmatprep.subr.mxu0 0.0
        %779 = vmatpush1.msra.mxu0 0.0
        %780 = vmatprep.subr.mxu0 0.0
        %781 = vmatpush1.msra.mxu0 0.0
        %782 = vmatprep.subr.mxu0 0.0
        %783 = vmatpush1.msra.mxu0 0.0
        %784 = vmatprep.subr.mxu0 0.0
        %785 = vmatpush1.msra.mxu0 0.0
        %786 = vmatprep.subr.mxu0 0.0
        %787 = vmatpush1.msra.mxu0 0.0
        %788 = vmatprep.subr.mxu0 0.0
        %789 = vmatpush1.msra.mxu0 0.0
        %790 = vmatprep.subr.mxu0 0.0
        %791 = vmatpush1.msra.mxu0 0.0
        %792 = vmatprep.subr.mxu0 0.0
        %793 = vmatpush1.msra.mxu0 0.0
        %794 = vmatprep.subr.mxu0 0.0
        %795 = vmatpush1.msra.mxu0 0.0
        %796 = vmatprep.subr.mxu0 0.0
        %797 = vmatpush1.msra.mxu0 0.0
        %798 = vmatprep.subr.mxu0 0.0
        %799 = vmatpush1.msra.mxu0 0.0
        %800 = vmatprep.subr.mxu0 0.0
        %801 = vmatpush1.msra.mxu0 0.0
        %802 = vmatprep.mubr.f32.mxu0 0.0
        %803 = vmatmul.mubr.f32.gmra.mrb[0].mxu0 %v715
        %v804 = vpop.f32.mrb[0].mxu0
        %v805 = vadd.f32 0.0, %v804
        %v806 = vpop.f32.mrb[0].mxu0
        %807 = vmatprep.mubr.f32.mxu0 0.0
        %808 = vmatmul.mubr.f32.gmra.mrb[0].mxu0 %v718
        %v809 = vpop.f32.mrb[0].mxu0
        %v810 = vadd.f32 0.0, %v809
        %v811 = vpop.f32.mrb[0].mxu0
        %812 = vmatprep.mubr.f32.mxu0 0.0
        %813 = vmatmul.mubr.f32.gmra.mrb[0].mxu0 %v721
        %v814 = vpop.f32.mrb[0].mxu0
        %v815 = vadd.f32 0.0, %v814
        %v816 = vpop.f32.mrb[0].mxu0
        %817 = vmatprep.mubr.f32.mxu0 0.0
        %818 = vmatmul.mubr.f32.gmra.mrb[0].mxu0 %v724
        %v819 = vpop.f32.mrb[0].mxu0
        %v820 = vadd.f32 0.0, %v819
        %v821 = vpop.f32.mrb[0].mxu0
        %822 = vmatprep.mubr.f32.mxu0 0.0
        %823 = vmatmul.mubr.f32.gmra.mrb[0].mxu0 %v727
        %v824 = vpop.f32.mrb[0].mxu0
        %v825 = vadd.f32 0.0, %v824
        %v826 = vpop.f32.mrb[0].mxu0
        %827 = vmatprep.mubr.f32.mxu0 0.0
        %828 = vmatmul.mubr.f32.gmra.mrb[0].mxu0 %v730
        %v829 = vpop.f32.mrb[0].mxu0
        %v830 = vadd.f32 0.0, %v829
        %v831 = vpop.f32.mrb[0].mxu0
        %832 = vmatprep.mubr.f32.mxu0 0.0
        %833 = vmatmul.mubr.f32.gmra.mrb[0].mxu0 %v733
        %v834 = vpop.f32.mrb[0].mxu0
        %v835 = vadd.f32 0.0, %v834
        %v836 = vpop.f32.mrb[0].mxu0
        %837 = vmatprep.mubr.f32.mxu0 0.0
        %838 = vmatmul.mubr.f32.gmra.mrb[0].mxu0 %v736
        %v839 = vpop.f32.mrb[0].mxu0
        %v840 = vadd.f32 0.0, %v839
        %v841 = vpop.f32.mrb[0].mxu0
        %842 = vdwg.mxu0
        %v844 = vsel %vm516, %v694, 0
        %v847 = vsel %vm516, %v695, 0
        %v850 = vsel %vm516, %v696, 0
        %v853 = vsel %vm516, %v697, 0
        %v856 = vsel %vm516, %v698, 0
        %v859 = vsel %vm516, %v699, 0
        %v862 = vsel %vm516, %v700, 0
        %v865 = vsel %vm516, %v701, 0
        %867 = vmatprep.subr.mxu0 0.0
        %868 = vmatpush1.msra.mxu0 %v702
        %869 = vmatprep.subr.mxu0 0.0
        %870 = vmatpush1.msra.mxu0 %v703
        %871 = vmatprep.subr.mxu0 0.0
        %872 = vmatpush1.msra.mxu0 0.0
        %873 = vmatprep.subr.mxu0 0.0
        %874 = vmatpush1.msra.mxu0 0.0
        %875 = vmatprep.subr.mxu0 0.0
        %876 = vmatpush1.msra.mxu0 0.0
        %877 = vmatprep.subr.mxu0 0.0
        %878 = vmatpush1.msra.mxu0 0.0
        %879 = vmatprep.subr.mxu0 0.0
        %880 = vmatpush1.msra.mxu0 0.0
        %881 = vmatprep.subr.mxu0 0.0
        %882 = vmatpush1.msra.mxu0 0.0
        %883 = vmatprep.subr.mxu0 0.0
        %884 = vmatpush1.msra.mxu0 0.0
        %885 = vmatprep.subr.mxu0 0.0
        %886 = vmatpush1.msra.mxu0 0.0
        %887 = vmatprep.subr.mxu0 0.0
        %888 = vmatpush1.msra.mxu0 0.0
        %889 = vmatprep.subr.mxu0 0.0
        %890 = vmatpush1.msra.mxu0 0.0
        %891 = vmatprep.subr.mxu0 0.0
        %892 = vmatpush1.msra.mxu0 0.0
        %893 = vmatprep.subr.mxu0 0.0
        %894 = vmatpush1.msra.mxu0 0.0
        %895 = vmatprep.subr.mxu0 0.0
        %896 = vmatpush1.msra.mxu0 0.0
        %897 = vmatprep.subr.mxu0 0.0
        %898 = vmatpush1.msra.mxu0 0.0
        %899 = vmatprep.subr.mxu0 0.0
        %900 = vmatpush1.msra.mxu0 0.0
        %901 = vmatprep.subr.mxu0 0.0
        %902 = vmatpush1.msra.mxu0 0.0
        %903 = vmatprep.subr.mxu0 0.0
        %904 = vmatpush1.msra.mxu0 0.0
        %905 = vmatprep.subr.mxu0 0.0
        %906 = vmatpush1.msra.mxu0 0.0
        %907 = vmatprep.subr.mxu0 0.0
        %908 = vmatpush1.msra.mxu0 0.0
        %909 = vmatprep.subr.mxu0 0.0
        %910 = vmatpush1.msra.mxu0 0.0
        %911 = vmatprep.subr.mxu0 0.0
        %912 = vmatpush1.msra.mxu0 0.0
        %913 = vmatprep.subr.mxu0 0.0
        %914 = vmatpush1.msra.mxu0 0.0
        %915 = vmatprep.subr.mxu0 0.0
        %916 = vmatpush1.msra.mxu0 0.0
        %917 = vmatprep.subr.mxu0 0.0
        %918 = vmatpush1.msra.mxu0 0.0
        %919 = vmatprep.subr.mxu0 0.0
        %920 = vmatpush1.msra.mxu0 0.0
        %921 = vmatprep.subr.mxu0 0.0
        %922 = vmatpush1.msra.mxu0 0.0
        %923 = vmatprep.subr.mxu0 0.0
        %924 = vmatpush1.msra.mxu0 0.0
        %925 = vmatprep.subr.mxu0 0.0
        %926 = vmatpush1.msra.mxu0 0.0
        %927 = vmatprep.subr.mxu0 0.0
        %928 = vmatpush1.msra.mxu0 0.0
        %929 = vmatprep.subr.mxu0 0.0
        %930 = vmatpush1.msra.mxu0 0.0
        %931 = vmatprep.mubr.f32.mxu0 0.0
        %932 = vmatmul.mubr.f32.gmra.mrb[0].mxu0 %v844
        %v933 = vpop.f32.mrb[0].mxu0
        %v934 = vadd.f32 %v805, %v933
        %v935 = vpop.f32.mrb[0].mxu0
        %936 = vmatprep.mubr.f32.mxu0 0.0
        %937 = vmatmul.mubr.f32.gmra.mrb[0].mxu0 %v847
        %v938 = vpop.f32.mrb[0].mxu0
        %v939 = vadd.f32 %v810, %v938
        %v940 = vpop.f32.mrb[0].mxu0
        %941 = vmatprep.mubr.f32.mxu0 0.0
        %942 = vmatmul.mubr.f32.gmra.mrb[0].mxu0 %v850
        %v943 = vpop.f32.mrb[0].mxu0
        %v944 = vadd.f32 %v815, %v943
        %v945 = vpop.f32.mrb[0].mxu0
        %946 = vmatprep.mubr.f32.mxu0 0.0
        %947 = vmatmul.mubr.f32.gmra.mrb[0].mxu0 %v853
        %v948 = vpop.f32.mrb[0].mxu0
        %v949 = vadd.f32 %v820, %v948
        %v950 = vpop.f32.mrb[0].mxu0
        %951 = vmatprep.mubr.f32.mxu0 0.0
        %952 = vmatmul.mubr.f32.gmra.mrb[0].mxu0 %v856
        %v953 = vpop.f32.mrb[0].mxu0
        %v954 = vadd.f32 %v825, %v953
        %v955 = vpop.f32.mrb[0].mxu0
        %956 = vmatprep.mubr.f32.mxu0 0.0
        %957 = vmatmul.mubr.f32.gmra.mrb[0].mxu0 %v859
        %v958 = vpop.f32.mrb[0].mxu0
        %v959 = vadd.f32 %v830, %v958
        %v960 = vpop.f32.mrb[0].mxu0
        %961 = vmatprep.mubr.f32.mxu0 0.0
        %962 = vmatmul.mubr.f32.gmra.mrb[0].mxu0 %v862
        %v963 = vpop.f32.mrb[0].mxu0
        %v964 = vadd.f32 %v835, %v963
        %v965 = vpop.f32.mrb[0].mxu0
        %966 = vmatprep.mubr.f32.mxu0 0.0
        %967 = vmatmul.mubr.f32.gmra.mrb[0].mxu0 %v865
        %v968 = vpop.f32.mrb[0].mxu0
        %v969 = vadd.f32 %v840, %v968
        %v970 = vpop.f32.mrb[0].mxu0
        %971 = vdwg.mxu0
        %v972 = vld [vmem:[%s9] sm:$0x1]
        %v974 = vlaneseq
        %v975 = vshrl.u32 %v974, 7
        %v976 = vsub.s32 0, %v975
        %v977 = vrot.slane %v972, %v976
        %v979 = vadd.f32 %v934, %v977
        %v980 = vadd.f32 %v939, %v977
        %v981 = vadd.f32 %v944, %v977
        %v982 = vadd.f32 %v949, %v977
        %v983 = vadd.f32 %v954, %v977
        %v984 = vadd.f32 %v959, %v977
        %v985 = vadd.f32 %v964, %v977
        %v986 = vadd.f32 %v969, %v977
        %vm987 = vcmp.gt.f32.partialorder %v979, 0.0
        %vm988 = vcmp.gt.f32.partialorder %v980, 0.0
        %vm989 = vcmp.gt.f32.partialorder %v981, 0.0
        %vm990 = vcmp.gt.f32.partialorder %v982, 0.0
        %vm991 = vcmp.gt.f32.partialorder %v983, 0.0
        %vm992 = vcmp.gt.f32.partialorder %v984, 0.0
        %vm993 = vcmp.gt.f32.partialorder %v985, 0.0
        %vm994 = vcmp.gt.f32.partialorder %v986, 0.0
        %v995 = vmul.f32 %v979, 0.01
        %v996 = vmul.f32 %v980, 0.01
        %v997 = vmul.f32 %v981, 0.01
        %v998 = vmul.f32 %v982, 0.01
        %v999 = vmul.f32 %v983, 0.01
        %v1000 = vmul.f32 %v984, 0.01
        %v1001 = vmul.f32 %v985, 0.01
        %v1002 = vmul.f32 %v986, 0.01
        %v1003 = vsel %vm987, %v979, %v995
        %v1004 = vsel %vm988, %v980, %v996
        %v1005 = vsel %vm989, %v981, %v997
        %v1006 = vsel %vm990, %v982, %v998
        %v1007 = vsel %vm991, %v983, %v999
        %v1008 = vsel %vm992, %v984, %v1000
        %v1009 = vsel %vm993, %v985, %v1001
        %v1010 = vsel %vm994, %v986, %v1002
        %v1019 = vcombine.high %v1003, %v1003
        %v1020 = vcombine.high %v1004, %v1004
        %v1021 = vcombine.high %v1005, %v1005
        %v1022 = vcombine.high %v1006, %v1006
        %v1023 = vcombine.high %v1007, %v1007
        %v1024 = vcombine.high %v1008, %v1008
        %v1025 = vcombine.high %v1009, %v1009
        %v1026 = vcombine.high %v1010, %v1010
        %v1037 = vcombine.high %v692, %v692
        %v1039 = vunpack.c.l.s4 1966171168
        %v1040 = vunpack.c.0.s8 %v1039
        %v1041 = vlaneseq
        %v1042 = vshrl.u32 %v1041, 7
        %v1043 = vsub.s32 %v1040, %v1042
        %v1044 = vrot.slane %v692, %v1043
        %v1046 = vunpack.c.l.s4 1966171168
        %v1047 = vunpack.c.0.s8 %v1046
        %v1048 = vlaneseq
        %v1049 = vshrl.u32 %v1048, 7
        %v1050 = vsub.s32 %v1047, %v1049
        %v1051 = vrot.slane %v1037, %v1050
        %v1052 = vcombine.high %v1044, %v1044
        %v1053 = vcombine.high %v1051, %v1051
        %v1055 = vunpack.c.l.s4 1966171168
        %v1056 = vunpack.c.0.s8 %v1055
        %v1057 = vlaneseq
        %v1058 = vshrl.u32 %v1057, 7
        %v1059 = vsub.s32 %v1056, %v1058
        %v1060 = vrot.slane %v1044, %v1059
        %v1062 = vunpack.c.l.s4 1966171168
        %v1063 = vunpack.c.0.s8 %v1062
        %v1064 = vlaneseq
        %v1065 = vshrl.u32 %v1064, 7
        %v1066 = vsub.s32 %v1063, %v1065
        %v1067 = vrot.slane %v1051, %v1066
        %v1069 = vunpack.c.l.s4 1966171168
        %v1070 = vunpack.c.0.s8 %v1069
        %v1071 = vlaneseq
        %v1072 = vshrl.u32 %v1071, 7
        %v1073 = vsub.s32 %v1070, %v1072
        %v1074 = vrot.slane %v1052, %v1073
        %v1076 = vunpack.c.l.s4 1966171168
        %v1077 = vunpack.c.0.s8 %v1076
        %v1078 = vlaneseq
        %v1079 = vshrl.u32 %v1078, 7
        %v1080 = vsub.s32 %v1077, %v1079
        %v1081 = vrot.slane %v1053, %v1080
        %v1082 = vcombine.high %v1060, %v1060
        %v1083 = vcombine.high %v1067, %v1067
        %v1084 = vcombine.high %v1074, %v1074
        %v1085 = vcombine.high %v1081, %v1081
        %v1086 = vcombine.high %v693, %v693
        %v1088 = vunpack.c.l.s4 1966171168
        %v1089 = vunpack.c.0.s8 %v1088
        %v1090 = vlaneseq
        %v1091 = vshrl.u32 %v1090, 7
        %v1092 = vsub.s32 %v1089, %v1091
        %v1093 = vrot.slane %v693, %v1092
        %v1095 = vunpack.c.l.s4 1966171168
        %v1096 = vunpack.c.0.s8 %v1095
        %v1097 = vlaneseq
        %v1098 = vshrl.u32 %v1097, 7
        %v1099 = vsub.s32 %v1096, %v1098
        %v1100 = vrot.slane %v1086, %v1099
        %v1101 = vcombine.high %v1093, %v1093
        %v1102 = vcombine.high %v1100, %v1100
        %v1104 = vunpack.c.l.s4 1966171168
        %v1105 = vunpack.c.0.s8 %v1104
        %v1106 = vlaneseq
        %v1107 = vshrl.u32 %v1106, 7
        %v1108 = vsub.s32 %v1105, %v1107
        %v1109 = vrot.slane %v1093, %v1108
        %v1111 = vunpack.c.l.s4 1966171168
        %v1112 = vunpack.c.0.s8 %v1111
        %v1113 = vlaneseq
        %v1114 = vshrl.u32 %v1113, 7
        %v1115 = vsub.s32 %v1112, %v1114
        %v1116 = vrot.slane %v1100, %v1115
        %v1118 = vunpack.c.l.s4 1966171168
        %v1119 = vunpack.c.0.s8 %v1118
        %v1120 = vlaneseq
        %v1121 = vshrl.u32 %v1120, 7
        %v1122 = vsub.s32 %v1119, %v1121
        %v1123 = vrot.slane %v1101, %v1122
        %v1125 = vunpack.c.l.s4 1966171168
        %v1126 = vunpack.c.0.s8 %v1125
        %v1127 = vlaneseq
        %v1128 = vshrl.u32 %v1127, 7
        %v1129 = vsub.s32 %v1126, %v1128
        %v1130 = vrot.slane %v1102, %v1129
        %v1131 = vcombine.high %v1109, %v1109
        %v1132 = vcombine.high %v1116, %v1116
        %v1133 = vcombine.high %v1123, %v1123
        %v1134 = vcombine.high %v1130, %v1130
        %v1135 = vlaneseq
        %v1136 = vshrl.u32 %v1135, 7
        %v1137 = vsub.s32 0, %v1136
        %v1138 = vrot.slane %v1060, %v1137
        %v1139 = vlaneseq
        %v1140 = vshrl.u32 %v1139, 7
        %v1141 = vsub.s32 0, %v1140
        %v1142 = vrot.slane %v1074, %v1141
        %v1143 = vlaneseq
        %v1144 = vshrl.u32 %v1143, 7
        %v1145 = vsub.s32 0, %v1144
        %v1146 = vrot.slane %v1082, %v1145
        %v1147 = vlaneseq
        %v1148 = vshrl.u32 %v1147, 7
        %v1149 = vsub.s32 0, %v1148
        %v1150 = vrot.slane %v1084, %v1149
        %v1151 = vlaneseq
        %v1152 = vshrl.u32 %v1151, 7
        %v1153 = vsub.s32 0, %v1152
        %v1154 = vrot.slane %v1067, %v1153
        %v1155 = vlaneseq
        %v1156 = vshrl.u32 %v1155, 7
        %v1157 = vsub.s32 0, %v1156
        %v1158 = vrot.slane %v1081, %v1157
        %v1159 = vlaneseq
        %v1160 = vshrl.u32 %v1159, 7
        %v1161 = vsub.s32 0, %v1160
        %v1162 = vrot.slane %v1083, %v1161
        %v1163 = vlaneseq
        %v1164 = vshrl.u32 %v1163, 7
        %v1165 = vsub.s32 0, %v1164
        %v1166 = vrot.slane %v1085, %v1165
        %v1167 = vlaneseq
        %v1168 = vshrl.u32 %v1167, 7
        %v1169 = vsub.s32 0, %v1168
        %v1170 = vrot.slane %v1109, %v1169
        %v1171 = vlaneseq
        %v1172 = vshrl.u32 %v1171, 7
        %v1173 = vsub.s32 0, %v1172
        %v1174 = vrot.slane %v1123, %v1173
        %v1175 = vlaneseq
        %v1176 = vshrl.u32 %v1175, 7
        %v1177 = vsub.s32 0, %v1176
        %v1178 = vrot.slane %v1131, %v1177
        %v1179 = vlaneseq
        %v1180 = vshrl.u32 %v1179, 7
        %v1181 = vsub.s32 0, %v1180
        %v1182 = vrot.slane %v1133, %v1181
        %v1183 = vlaneseq
        %v1184 = vshrl.u32 %v1183, 7
        %v1185 = vsub.s32 0, %v1184
        %v1186 = vrot.slane %v1116, %v1185
        %v1187 = vlaneseq
        %v1188 = vshrl.u32 %v1187, 7
        %v1189 = vsub.s32 0, %v1188
        %v1190 = vrot.slane %v1130, %v1189
        %v1191 = vlaneseq
        %v1192 = vshrl.u32 %v1191, 7
        %v1193 = vsub.s32 0, %v1192
        %v1194 = vrot.slane %v1132, %v1193
        %v1195 = vlaneseq
        %v1196 = vshrl.u32 %v1195, 7
        %v1197 = vsub.s32 0, %v1196
        %v1198 = vrot.slane %v1134, %v1197
        %v1215 = vmul.f32 %v1003, %v1138
        %v1216 = vmul.f32 %v1019, %v1142
        %v1217 = vmul.f32 %v1004, %v1146
        %v1218 = vmul.f32 %v1020, %v1150
        %v1219 = vmul.f32 %v1005, %v1154
        %v1220 = vmul.f32 %v1021, %v1158
        %v1221 = vmul.f32 %v1006, %v1162
        %v1222 = vmul.f32 %v1022, %v1166
        %v1223 = vmul.f32 %v1007, %v1170
        %v1224 = vmul.f32 %v1023, %v1174
        %v1225 = vmul.f32 %v1008, %v1178
        %v1226 = vmul.f32 %v1024, %v1182
        %v1227 = vmul.f32 %v1009, %v1186
        %v1228 = vmul.f32 %v1025, %v1190
        %v1229 = vmul.f32 %v1010, %v1194
        %v1230 = vmul.f32 %v1026, %v1198
        %vm1231 = vcmask 1043456
        %v1232 = vsel %vm1231, %v1215, 0.0
        %1233 = vadd.xlane.f32.xlu0 %v1232
        %v1234 = vpop.xlane.xlu0 %1233
        %v1235 = vsel %vm1231, %v1216, 0.0
        %1236 = vadd.xlane.f32.xlu0 %v1235
        %v1237 = vpop.xlane.xlu0 %1236
        %v1238 = vsel %vm1231, %v1217, 0.0
        %1239 = vadd.xlane.f32.xlu0 %v1238
        %v1240 = vpop.xlane.xlu0 %1239
        %v1241 = vsel %vm1231, %v1218, 0.0
        %1242 = vadd.xlane.f32.xlu0 %v1241
        %v1243 = vpop.xlane.xlu0 %1242
        %v1244 = vsel %vm1231, %v1219, 0.0
        %1245 = vadd.xlane.f32.xlu0 %v1244
        %v1246 = vpop.xlane.xlu0 %1245
        %v1247 = vsel %vm1231, %v1220, 0.0
        %1248 = vadd.xlane.f32.xlu0 %v1247
        %v1249 = vpop.xlane.xlu0 %1248
        %v1250 = vsel %vm1231, %v1221, 0.0
        %1251 = vadd.xlane.f32.xlu0 %v1250
        %v1252 = vpop.xlane.xlu0 %1251
        %v1253 = vsel %vm1231, %v1222, 0.0
        %1254 = vadd.xlane.f32.xlu0 %v1253
        %v1255 = vpop.xlane.xlu0 %1254
        %v1256 = vsel %vm1231, %v1223, 0.0
        %1257 = vadd.xlane.f32.xlu0 %v1256
        %v1258 = vpop.xlane.xlu0 %1257
        %v1259 = vsel %vm1231, %v1224, 0.0
        %1260 = vadd.xlane.f32.xlu0 %v1259
        %v1261 = vpop.xlane.xlu0 %1260
        %v1262 = vsel %vm1231, %v1225, 0.0
        %1263 = vadd.xlane.f32.xlu0 %v1262
        %v1264 = vpop.xlane.xlu0 %1263
        %v1265 = vsel %vm1231, %v1226, 0.0
        %1266 = vadd.xlane.f32.xlu0 %v1265
        %v1267 = vpop.xlane.xlu0 %1266
        %v1268 = vsel %vm1231, %v1227, 0.0
        %1269 = vadd.xlane.f32.xlu0 %v1268
        %v1270 = vpop.xlane.xlu0 %1269
        %v1271 = vsel %vm1231, %v1228, 0.0
        %1272 = vadd.xlane.f32.xlu0 %v1271
        %v1273 = vpop.xlane.xlu0 %1272
        %v1274 = vsel %vm1231, %v1229, 0.0
        %1275 = vadd.xlane.f32.xlu0 %v1274
        %v1276 = vpop.xlane.xlu0 %1275
        %v1277 = vsel %vm1231, %v1230, 0.0
        %1278 = vadd.xlane.f32.xlu0 %v1277
        %v1279 = vpop.xlane.xlu0 %1278
        %v1296 = vlaneseq
        %v1297 = vand.u32 %v1296, 127
        %v1298 = vlaneseq
        %v1299 = vshrl.u32 %v1298, 7
        %v1300 = vsub.s32 %v1297, %v1299
        %v1301 = vrot.slane %v1234, %v1300
        %v1302 = vlaneseq
        %v1303 = vshrl.u32 %v1302, 7
        %v1304 = vsub.s32 %v1297, %v1303
        %v1305 = vrot.slane %v1237, %v1304
        %v1306 = vlaneseq
        %v1307 = vshrl.u32 %v1306, 7
        %v1308 = vsub.s32 %v1297, %v1307
        %v1309 = vrot.slane %v1240, %v1308
        %v1310 = vlaneseq
        %v1311 = vshrl.u32 %v1310, 7
        %v1312 = vsub.s32 %v1297, %v1311
        %v1313 = vrot.slane %v1243, %v1312
        %v1314 = vlaneseq
        %v1315 = vshrl.u32 %v1314, 7
        %v1316 = vsub.s32 %v1297, %v1315
        %v1317 = vrot.slane %v1246, %v1316
        %v1318 = vlaneseq
        %v1319 = vshrl.u32 %v1318, 7
        %v1320 = vsub.s32 %v1297, %v1319
        %v1321 = vrot.slane %v1249, %v1320
        %v1322 = vlaneseq
        %v1323 = vshrl.u32 %v1322, 7
        %v1324 = vsub.s32 %v1297, %v1323
        %v1325 = vrot.slane %v1252, %v1324
        %v1326 = vlaneseq
        %v1327 = vshrl.u32 %v1326, 7
        %v1328 = vsub.s32 %v1297, %v1327
        %v1329 = vrot.slane %v1255, %v1328
        %v1330 = vlaneseq
        %v1331 = vshrl.u32 %v1330, 7
        %v1332 = vsub.s32 %v1297, %v1331
        %v1333 = vrot.slane %v1258, %v1332
        %v1334 = vlaneseq
        %v1335 = vshrl.u32 %v1334, 7
        %v1336 = vsub.s32 %v1297, %v1335
        %v1337 = vrot.slane %v1261, %v1336
        %v1338 = vlaneseq
        %v1339 = vshrl.u32 %v1338, 7
        %v1340 = vsub.s32 %v1297, %v1339
        %v1341 = vrot.slane %v1264, %v1340
        %v1342 = vlaneseq
        %v1343 = vshrl.u32 %v1342, 7
        %v1344 = vsub.s32 %v1297, %v1343
        %v1345 = vrot.slane %v1267, %v1344
        %v1346 = vlaneseq
        %v1347 = vshrl.u32 %v1346, 7
        %v1348 = vsub.s32 %v1297, %v1347
        %v1349 = vrot.slane %v1270, %v1348
        %v1350 = vlaneseq
        %v1351 = vshrl.u32 %v1350, 7
        %v1352 = vsub.s32 %v1297, %v1351
        %v1353 = vrot.slane %v1273, %v1352
        %v1354 = vlaneseq
        %v1355 = vshrl.u32 %v1354, 7
        %v1356 = vsub.s32 %v1297, %v1355
        %v1357 = vrot.slane %v1276, %v1356
        %v1358 = vlaneseq
        %v1359 = vshrl.u32 %v1358, 7
        %v1360 = vsub.s32 %v1297, %v1359
        %v1361 = vrot.slane %v1279, %v1360
        %vm1362 = vcmask 1041409
        %v1363 = vsel %vm1362, %v1305, %v1301
        %vm1364 = vcmask 1042434
        %v1365 = vsel %vm1364, %v1309, %v1363
        %vm1366 = vcmask 1043459
        %v1367 = vsel %vm1366, %v1313, %v1365
        %vm1368 = vcmask 1044484
        %v1369 = vsel %vm1368, %v1317, %v1367
        %vm1370 = vcmask 1045509
        %v1371 = vsel %vm1370, %v1321, %v1369
        %vm1372 = vcmask 1046534
        %v1373 = vsel %vm1372, %v1325, %v1371
        %vm1374 = vcmask 1047559
        %v1375 = vsel %vm1374, %v1329, %v1373
        %v1376 = vsel %vm1362, %v1337, %v1333
        %v1377 = vsel %vm1364, %v1341, %v1376
        %v1378 = vsel %vm1366, %v1345, %v1377
        %v1379 = vsel %vm1368, %v1349, %v1378
        %v1380 = vsel %vm1370, %v1353, %v1379
        %v1381 = vsel %vm1372, %v1357, %v1380
        %v1382 = vsel %vm1374, %v1361, %v1381
        %vm1385 = vcmask 31744
        %v1386 = vsel %vm1385, %v1375, -inf
        %1387 = vmax.xlane.f32.xlu0 %v1386
        %v1388 = vpop.xlane.xlu0 %1387
        %v1389 = vsel %vm1385, %v1382, -inf
        %1390 = vmax.xlane.f32.xlu0 %v1389
        %v1391 = vpop.xlane.xlu0 %1390
        %v1394 = vlaneseq
        %v1395 = vshrl.u32 %v1394, 7
        %v1396 = vsub.s32 0, %v1395
        %v1397 = vrot.slane %v1388, %v1396
        %v1398 = vlaneseq
        %v1399 = vshrl.u32 %v1398, 7
        %v1400 = vsub.s32 1, %v1399
        %v1401 = vrot.slane %v1388, %v1400
        %v1402 = vlaneseq
        %v1403 = vshrl.u32 %v1402, 7
        %v1404 = vsub.s32 2, %v1403
        %v1405 = vrot.slane %v1388, %v1404
        %v1406 = vlaneseq
        %v1407 = vshrl.u32 %v1406, 7
        %v1408 = vsub.s32 3, %v1407
        %v1409 = vrot.slane %v1388, %v1408
        %v1410 = vlaneseq
        %v1411 = vshrl.u32 %v1410, 7
        %v1412 = vsub.s32 4, %v1411
        %v1413 = vrot.slane %v1388, %v1412
        %v1414 = vlaneseq
        %v1415 = vshrl.u32 %v1414, 7
        %v1416 = vsub.s32 5, %v1415
        %v1417 = vrot.slane %v1388, %v1416
        %v1418 = vlaneseq
        %v1419 = vshrl.u32 %v1418, 7
        %v1420 = vsub.s32 6, %v1419
        %v1421 = vrot.slane %v1388, %v1420
        %v1422 = vlaneseq
        %v1423 = vshrl.u32 %v1422, 7
        %v1424 = vsub.s32 7, %v1423
        %v1425 = vrot.slane %v1388, %v1424
        %v1426 = vlaneseq
        %v1427 = vshrl.u32 %v1426, 7
        %v1428 = vsub.s32 0, %v1427
        %v1429 = vrot.slane %v1391, %v1428
        %v1430 = vlaneseq
        %v1431 = vshrl.u32 %v1430, 7
        %v1432 = vsub.s32 1, %v1431
        %v1433 = vrot.slane %v1391, %v1432
        %v1434 = vlaneseq
        %v1435 = vshrl.u32 %v1434, 7
        %v1436 = vsub.s32 2, %v1435
        %v1437 = vrot.slane %v1391, %v1436
        %v1438 = vlaneseq
        %v1439 = vshrl.u32 %v1438, 7
        %v1440 = vsub.s32 3, %v1439
        %v1441 = vrot.slane %v1391, %v1440
        %v1442 = vlaneseq
        %v1443 = vshrl.u32 %v1442, 7
        %v1444 = vsub.s32 4, %v1443
        %v1445 = vrot.slane %v1391, %v1444
        %v1446 = vlaneseq
        %v1447 = vshrl.u32 %v1446, 7
        %v1448 = vsub.s32 5, %v1447
        %v1449 = vrot.slane %v1391, %v1448
        %v1450 = vlaneseq
        %v1451 = vshrl.u32 %v1450, 7
        %v1452 = vsub.s32 6, %v1451
        %v1453 = vrot.slane %v1391, %v1452
        %v1454 = vlaneseq
        %v1455 = vshrl.u32 %v1454, 7
        %v1456 = vsub.s32 7, %v1455
        %v1457 = vrot.slane %v1391, %v1456
        %v1474 = vsub.f32 %v1234, %v1397
        %v1475 = vsub.f32 %v1237, %v1401
        %v1476 = vsub.f32 %v1240, %v1405
        %v1477 = vsub.f32 %v1243, %v1409
        %v1478 = vsub.f32 %v1246, %v1413
        %v1479 = vsub.f32 %v1249, %v1417
        %v1480 = vsub.f32 %v1252, %v1421
        %v1481 = vsub.f32 %v1255, %v1425
        %v1482 = vsub.f32 %v1258, %v1429
        %v1483 = vsub.f32 %v1261, %v1433
        %v1484 = vsub.f32 %v1264, %v1437
        %v1485 = vsub.f32 %v1267, %v1441
        %v1486 = vsub.f32 %v1270, %v1445
        %v1487 = vsub.f32 %v1273, %v1449
        %v1488 = vsub.f32 %v1276, %v1453
        %v1489 = vsub.f32 %v1279, %v1457
        %v1490 = vmul.f32 %v1474, 1.442695
        %v1491 = vpow.pop %v1490
        %v1492 = vmul.f32 %v1475, 1.442695
        %v1493 = vpow.pop %v1492
        %v1494 = vmul.f32 %v1476, 1.442695
        %v1495 = vpow.pop %v1494
        %v1496 = vmul.f32 %v1477, 1.442695
        %v1497 = vpow.pop %v1496
        %v1498 = vmul.f32 %v1478, 1.442695
        %v1499 = vpow.pop %v1498
        %v1500 = vmul.f32 %v1479, 1.442695
        %v1501 = vpow.pop %v1500
        %v1502 = vmul.f32 %v1480, 1.442695
        %v1503 = vpow.pop %v1502
        %v1504 = vmul.f32 %v1481, 1.442695
        %v1505 = vpow.pop %v1504
        %v1506 = vmul.f32 %v1482, 1.442695
        %v1507 = vpow.pop %v1506
        %v1508 = vmul.f32 %v1483, 1.442695
        %v1509 = vpow.pop %v1508
        %v1510 = vmul.f32 %v1484, 1.442695
        %v1511 = vpow.pop %v1510
        %v1512 = vmul.f32 %v1485, 1.442695
        %v1513 = vpow.pop %v1512
        %v1514 = vmul.f32 %v1486, 1.442695
        %v1515 = vpow.pop %v1514
        %v1516 = vmul.f32 %v1487, 1.442695
        %v1517 = vpow.pop %v1516
        %v1518 = vmul.f32 %v1488, 1.442695
        %v1519 = vpow.pop %v1518
        %v1520 = vmul.f32 %v1489, 1.442695
        %v1521 = vpow.pop %v1520
        %1538 = vset.pattern.permute.xlu0 0
        %1539 = vperm.xlu0 %1538, %v1491
        %v1540 = vpop.permute.xlu0 %1539
        %1541 = vset.pattern.permute.xlu0 0
        %1542 = vperm.xlu0 %1541, %v1493
        %v1543 = vpop.permute.xlu0 %1542
        %1544 = vset.pattern.permute.xlu0 0
        %1545 = vperm.xlu0 %1544, %v1495
        %v1546 = vpop.permute.xlu0 %1545
        %1547 = vset.pattern.permute.xlu0 0
        %1548 = vperm.xlu0 %1547, %v1497
        %v1549 = vpop.permute.xlu0 %1548
        %1550 = vset.pattern.permute.xlu0 0
        %1551 = vperm.xlu0 %1550, %v1499
        %v1552 = vpop.permute.xlu0 %1551
        %1553 = vset.pattern.permute.xlu0 0
        %1554 = vperm.xlu0 %1553, %v1501
        %v1555 = vpop.permute.xlu0 %1554
        %1556 = vset.pattern.permute.xlu0 0
        %1557 = vperm.xlu0 %1556, %v1503
        %v1558 = vpop.permute.xlu0 %1557
        %1559 = vset.pattern.permute.xlu0 0
        %1560 = vperm.xlu0 %1559, %v1505
        %v1561 = vpop.permute.xlu0 %1560
        %1562 = vset.pattern.permute.xlu0 0
        %1563 = vperm.xlu0 %1562, %v1507
        %v1564 = vpop.permute.xlu0 %1563
        %1565 = vset.pattern.permute.xlu0 0
        %1566 = vperm.xlu0 %1565, %v1509
        %v1567 = vpop.permute.xlu0 %1566
        %1568 = vset.pattern.permute.xlu0 0
        %1569 = vperm.xlu0 %1568, %v1511
        %v1570 = vpop.permute.xlu0 %1569
        %1571 = vset.pattern.permute.xlu0 0
        %1572 = vperm.xlu0 %1571, %v1513
        %v1573 = vpop.permute.xlu0 %1572
        %1574 = vset.pattern.permute.xlu0 0
        %1575 = vperm.xlu0 %1574, %v1515
        %v1576 = vpop.permute.xlu0 %1575
        %1577 = vset.pattern.permute.xlu0 0
        %1578 = vperm.xlu0 %1577, %v1517
        %v1579 = vpop.permute.xlu0 %1578
        %1580 = vset.pattern.permute.xlu0 0
        %1581 = vperm.xlu0 %1580, %v1519
        %v1582 = vpop.permute.xlu0 %1581
        %1583 = vset.pattern.permute.xlu0 0
        %1584 = vperm.xlu0 %1583, %v1521
        %v1585 = vpop.permute.xlu0 %1584
        %v1586 = vlaneseq
        %v1587 = vshrl.u32 %v1586, 7
        %v1588 = vsub.s32 %v1297, %v1587
        %v1589 = vrot.slane %v1540, %v1588
        %v1590 = vlaneseq
        %v1591 = vshrl.u32 %v1590, 7
        %v1592 = vsub.s32 %v1297, %v1591
        %v1593 = vrot.slane %v1543, %v1592
        %v1594 = vlaneseq
        %v1595 = vshrl.u32 %v1594, 7
        %v1596 = vsub.s32 %v1297, %v1595
        %v1597 = vrot.slane %v1546, %v1596
        %v1598 = vlaneseq
        %v1599 = vshrl.u32 %v1598, 7
        %v1600 = vsub.s32 %v1297, %v1599
        %v1601 = vrot.slane %v1549, %v1600
        %v1602 = vlaneseq
        %v1603 = vshrl.u32 %v1602, 7
        %v1604 = vsub.s32 %v1297, %v1603
        %v1605 = vrot.slane %v1552, %v1604
        %v1606 = vlaneseq
        %v1607 = vshrl.u32 %v1606, 7
        %v1608 = vsub.s32 %v1297, %v1607
        %v1609 = vrot.slane %v1555, %v1608
        %v1610 = vlaneseq
        %v1611 = vshrl.u32 %v1610, 7
        %v1612 = vsub.s32 %v1297, %v1611
        %v1613 = vrot.slane %v1558, %v1612
        %v1614 = vlaneseq
        %v1615 = vshrl.u32 %v1614, 7
        %v1616 = vsub.s32 %v1297, %v1615
        %v1617 = vrot.slane %v1561, %v1616
        %v1618 = vlaneseq
        %v1619 = vshrl.u32 %v1618, 7
        %v1620 = vsub.s32 %v1297, %v1619
        %v1621 = vrot.slane %v1564, %v1620
        %v1622 = vlaneseq
        %v1623 = vshrl.u32 %v1622, 7
        %v1624 = vsub.s32 %v1297, %v1623
        %v1625 = vrot.slane %v1567, %v1624
        %v1626 = vlaneseq
        %v1627 = vshrl.u32 %v1626, 7
        %v1628 = vsub.s32 %v1297, %v1627
        %v1629 = vrot.slane %v1570, %v1628
        %v1630 = vlaneseq
        %v1631 = vshrl.u32 %v1630, 7
        %v1632 = vsub.s32 %v1297, %v1631
        %v1633 = vrot.slane %v1573, %v1632
        %v1634 = vlaneseq
        %v1635 = vshrl.u32 %v1634, 7
        %v1636 = vsub.s32 %v1297, %v1635
        %v1637 = vrot.slane %v1576, %v1636
        %v1638 = vlaneseq
        %v1639 = vshrl.u32 %v1638, 7
        %v1640 = vsub.s32 %v1297, %v1639
        %v1641 = vrot.slane %v1579, %v1640
        %v1642 = vlaneseq
        %v1643 = vshrl.u32 %v1642, 7
        %v1644 = vsub.s32 %v1297, %v1643
        %v1645 = vrot.slane %v1582, %v1644
        %v1646 = vlaneseq
        %v1647 = vshrl.u32 %v1646, 7
        %v1648 = vsub.s32 %v1297, %v1647
        %v1649 = vrot.slane %v1585, %v1648
        %v1650 = vsel %vm1362, %v1593, %v1589
        %v1651 = vsel %vm1364, %v1597, %v1650
        %v1652 = vsel %vm1366, %v1601, %v1651
        %v1653 = vsel %vm1368, %v1605, %v1652
        %v1654 = vsel %vm1370, %v1609, %v1653
        %v1655 = vsel %vm1372, %v1613, %v1654
        %v1656 = vsel %vm1374, %v1617, %v1655
        %v1657 = vsel %vm1362, %v1625, %v1621
        %v1658 = vsel %vm1364, %v1629, %v1657
        %v1659 = vsel %vm1366, %v1633, %v1658
        %v1660 = vsel %vm1368, %v1637, %v1659
        %v1661 = vsel %vm1370, %v1641, %v1660
        %v1662 = vsel %vm1372, %v1645, %v1661
        %v1663 = vsel %vm1374, %v1649, %v1662
        %v1666 = vsel %vm1385, %v1656, 0.0
        %1667 = vadd.xlane.f32.xlu0 %v1666
        %v1668 = vpop.xlane.xlu0 %1667
        %v1669 = vsel %vm1385, %v1663, 0.0
        %1670 = vadd.xlane.f32.xlu0 %v1669
        %v1671 = vpop.xlane.xlu0 %1670
        %v1672 = vrcp.pop %v1668
        %v1673 = vrcp.pop %v1671
        %v1676 = vlaneseq
        %v1677 = vshrl.u32 %v1676, 7
        %v1678 = vsub.s32 0, %v1677
        %v1679 = vrot.slane %v1672, %v1678
        %v1680 = vlaneseq
        %v1681 = vshrl.u32 %v1680, 7
        %v1682 = vsub.s32 1, %v1681
        %v1683 = vrot.slane %v1672, %v1682
        %v1684 = vlaneseq
        %v1685 = vshrl.u32 %v1684, 7
        %v1686 = vsub.s32 2, %v1685
        %v1687 = vrot.slane %v1672, %v1686
        %v1688 = vlaneseq
        %v1689 = vshrl.u32 %v1688, 7
        %v1690 = vsub.s32 3, %v1689
        %v1691 = vrot.slane %v1672, %v1690
        %v1692 = vlaneseq
        %v1693 = vshrl.u32 %v1692, 7
        %v1694 = vsub.s32 4, %v1693
        %v1695 = vrot.slane %v1672, %v1694
        %v1696 = vlaneseq
        %v1697 = vshrl.u32 %v1696, 7
        %v1698 = vsub.s32 5, %v1697
        %v1699 = vrot.slane %v1672, %v1698
        %v1700 = vlaneseq
        %v1701 = vshrl.u32 %v1700, 7
        %v1702 = vsub.s32 6, %v1701
        %v1703 = vrot.slane %v1672, %v1702
        %v1704 = vlaneseq
        %v1705 = vshrl.u32 %v1704, 7
        %v1706 = vsub.s32 7, %v1705
        %v1707 = vrot.slane %v1672, %v1706
        %v1708 = vlaneseq
        %v1709 = vshrl.u32 %v1708, 7
        %v1710 = vsub.s32 0, %v1709
        %v1711 = vrot.slane %v1673, %v1710
        %v1712 = vlaneseq
        %v1713 = vshrl.u32 %v1712, 7
        %v1714 = vsub.s32 1, %v1713
        %v1715 = vrot.slane %v1673, %v1714
        %v1716 = vlaneseq
        %v1717 = vshrl.u32 %v1716, 7
        %v1718 = vsub.s32 2, %v1717
        %v1719 = vrot.slane %v1673, %v1718
        %v1720 = vlaneseq
        %v1721 = vshrl.u32 %v1720, 7
        %v1722 = vsub.s32 3, %v1721
        %v1723 = vrot.slane %v1673, %v1722
        %v1724 = vlaneseq
        %v1725 = vshrl.u32 %v1724, 7
        %v1726 = vsub.s32 4, %v1725
        %v1727 = vrot.slane %v1673, %v1726
        %v1728 = vlaneseq
        %v1729 = vshrl.u32 %v1728, 7
        %v1730 = vsub.s32 5, %v1729
        %v1731 = vrot.slane %v1673, %v1730
        %v1732 = vlaneseq
        %v1733 = vshrl.u32 %v1732, 7
        %v1734 = vsub.s32 6, %v1733
        %v1735 = vrot.slane %v1673, %v1734
        %v1736 = vlaneseq
        %v1737 = vshrl.u32 %v1736, 7
        %v1738 = vsub.s32 7, %v1737
        %v1739 = vrot.slane %v1673, %v1738
        %v1756 = vmul.f32 %v1491, %v1679
        %v1757 = vmul.f32 %v1493, %v1683
        %v1758 = vmul.f32 %v1495, %v1687
        %v1759 = vmul.f32 %v1497, %v1691
        %v1760 = vmul.f32 %v1499, %v1695
        %v1761 = vmul.f32 %v1501, %v1699
        %v1762 = vmul.f32 %v1503, %v1703
        %v1763 = vmul.f32 %v1505, %v1707
        %v1764 = vmul.f32 %v1507, %v1711
        %v1765 = vmul.f32 %v1509, %v1715
        %v1766 = vmul.f32 %v1511, %v1719
        %v1767 = vmul.f32 %v1513, %v1723
        %v1768 = vmul.f32 %v1515, %v1727
        %v1769 = vmul.f32 %v1517, %v1731
        %v1770 = vmul.f32 %v1519, %v1735
        %v1771 = vmul.f32 %v1521, %v1739
        %1773 = vset.pattern.permute.xlu0 0
        %1774 = vperm.xlu0 %1773, %v1756
        %v1775 = vpop.permute.xlu0 %1774
        %1778 = vset.pattern.permute.xlu0 0
        %1779 = vperm.xlu0 %1778, %v1757
        %v1780 = vpop.permute.xlu0 %1779
        %1783 = vset.pattern.permute.xlu0 0
        %1784 = vperm.xlu0 %1783, %v1758
        %v1785 = vpop.permute.xlu0 %1784
        %1788 = vset.pattern.permute.xlu0 0
        %1789 = vperm.xlu0 %1788, %v1759
        %v1790 = vpop.permute.xlu0 %1789
        %1793 = vset.pattern.permute.xlu0 0
        %1794 = vperm.xlu0 %1793, %v1760
        %v1795 = vpop.permute.xlu0 %1794
        %1798 = vset.pattern.permute.xlu0 0
        %1799 = vperm.xlu0 %1798, %v1761
        %v1800 = vpop.permute.xlu0 %1799
        %1803 = vset.pattern.permute.xlu0 0
        %1804 = vperm.xlu0 %1803, %v1762
        %v1805 = vpop.permute.xlu0 %1804
        %1808 = vset.pattern.permute.xlu0 0
        %1809 = vperm.xlu0 %1808, %v1763
        %v1810 = vpop.permute.xlu0 %1809
        %1813 = vset.pattern.permute.xlu0 0
        %1814 = vperm.xlu0 %1813, %v1764
        %v1815 = vpop.permute.xlu0 %1814
        %1818 = vset.pattern.permute.xlu0 0
        %1819 = vperm.xlu0 %1818, %v1765
        %v1820 = vpop.permute.xlu0 %1819
        %1823 = vset.pattern.permute.xlu0 0
        %1824 = vperm.xlu0 %1823, %v1766
        %v1825 = vpop.permute.xlu0 %1824
        %1828 = vset.pattern.permute.xlu0 0
        %1829 = vperm.xlu0 %1828, %v1767
        %v1830 = vpop.permute.xlu0 %1829
        %1833 = vset.pattern.permute.xlu0 0
        %1834 = vperm.xlu0 %1833, %v1768
        %v1835 = vpop.permute.xlu0 %1834
        %1838 = vset.pattern.permute.xlu0 0
        %1839 = vperm.xlu0 %1838, %v1769
        %v1840 = vpop.permute.xlu0 %1839
        %1843 = vset.pattern.permute.xlu0 0
        %1844 = vperm.xlu0 %1843, %v1770
        %v1845 = vpop.permute.xlu0 %1844
        %1848 = vset.pattern.permute.xlu0 0
        %1849 = vperm.xlu0 %1848, %v1771
        %v1850 = vpop.permute.xlu0 %1849
        %v1852 = vmul.f32 %v1003, %v1775
        %v1853 = vmul.f32 %v1019, %v1780
        %v1854 = vmul.f32 %v1004, %v1785
        %v1855 = vmul.f32 %v1020, %v1790
        %v1856 = vmul.f32 %v1005, %v1795
        %v1857 = vmul.f32 %v1021, %v1800
        %v1858 = vmul.f32 %v1006, %v1805
        %v1859 = vmul.f32 %v1022, %v1810
        %v1860 = vmul.f32 %v1007, %v1815
        %v1861 = vmul.f32 %v1023, %v1820
        %v1862 = vmul.f32 %v1008, %v1825
        %v1863 = vmul.f32 %v1024, %v1830
        %v1864 = vmul.f32 %v1009, %v1835
        %v1865 = vmul.f32 %v1025, %v1840
        %v1866 = vmul.f32 %v1010, %v1845
        %v1867 = vmul.f32 %v1026, %v1850
        %v1868 = vsel %vm1231, %v1852, 0.0
        %v1869 = vrot.slane %v1868, 4
        %v1870 = vadd.f32 %v1868, %v1869
        %v1871 = vrot.slane %v1870, 2
        %v1872 = vadd.f32 %v1870, %v1871
        %v1873 = vrot.slane %v1872, 1
        %v1874 = vadd.f32 %v1872, %v1873
        %v1875 = vsel %vm1231, %v1853, 0.0
        %v1876 = vrot.slane %v1875, 4
        %v1877 = vadd.f32 %v1875, %v1876
        %v1878 = vrot.slane %v1877, 2
        %v1879 = vadd.f32 %v1877, %v1878
        %v1880 = vrot.slane %v1879, 1
        %v1881 = vadd.f32 %v1879, %v1880
        %v1882 = vsel %vm1231, %v1854, 0.0
        %v1883 = vrot.slane %v1882, 4
        %v1884 = vadd.f32 %v1882, %v1883
        %v1885 = vrot.slane %v1884, 2
        %v1886 = vadd.f32 %v1884, %v1885
        %v1887 = vrot.slane %v1886, 1
        %v1888 = vadd.f32 %v1886, %v1887
        %v1889 = vsel %vm1231, %v1855, 0.0
        %v1890 = vrot.slane %v1889, 4
        %v1891 = vadd.f32 %v1889, %v1890
        %v1892 = vrot.slane %v1891, 2
        %v1893 = vadd.f32 %v1891, %v1892
        %v1894 = vrot.slane %v1893, 1
        %v1895 = vadd.f32 %v1893, %v1894
        %v1896 = vsel %vm1231, %v1856, 0.0
        %v1897 = vrot.slane %v1896, 4
        %v1898 = vadd.f32 %v1896, %v1897
        %v1899 = vrot.slane %v1898, 2
        %v1900 = vadd.f32 %v1898, %v1899
        %v1901 = vrot.slane %v1900, 1
        %v1902 = vadd.f32 %v1900, %v1901
        %v1903 = vsel %vm1231, %v1857, 0.0
        %v1904 = vrot.slane %v1903, 4
        %v1905 = vadd.f32 %v1903, %v1904
        %v1906 = vrot.slane %v1905, 2
        %v1907 = vadd.f32 %v1905, %v1906
        %v1908 = vrot.slane %v1907, 1
        %v1909 = vadd.f32 %v1907, %v1908
        %v1910 = vsel %vm1231, %v1858, 0.0
        %v1911 = vrot.slane %v1910, 4
        %v1912 = vadd.f32 %v1910, %v1911
        %v1913 = vrot.slane %v1912, 2
        %v1914 = vadd.f32 %v1912, %v1913
        %v1915 = vrot.slane %v1914, 1
        %v1916 = vadd.f32 %v1914, %v1915
        %v1917 = vsel %vm1231, %v1859, 0.0
        %v1918 = vrot.slane %v1917, 4
        %v1919 = vadd.f32 %v1917, %v1918
        %v1920 = vrot.slane %v1919, 2
        %v1921 = vadd.f32 %v1919, %v1920
        %v1922 = vrot.slane %v1921, 1
        %v1923 = vadd.f32 %v1921, %v1922
        %v1924 = vsel %vm1231, %v1860, 0.0
        %v1925 = vrot.slane %v1924, 4
        %v1926 = vadd.f32 %v1924, %v1925
        %v1927 = vrot.slane %v1926, 2
        %v1928 = vadd.f32 %v1926, %v1927
        %v1929 = vrot.slane %v1928, 1
        %v1930 = vadd.f32 %v1928, %v1929
        %v1931 = vsel %vm1231, %v1861, 0.0
        %v1932 = vrot.slane %v1931, 4
        %v1933 = vadd.f32 %v1931, %v1932
        %v1934 = vrot.slane %v1933, 2
        %v1935 = vadd.f32 %v1933, %v1934
        %v1936 = vrot.slane %v1935, 1
        %v1937 = vadd.f32 %v1935, %v1936
        %v1938 = vsel %vm1231, %v1862, 0.0
        %v1939 = vrot.slane %v1938, 4
        %v1940 = vadd.f32 %v1938, %v1939
        %v1941 = vrot.slane %v1940, 2
        %v1942 = vadd.f32 %v1940, %v1941
        %v1943 = vrot.slane %v1942, 1
        %v1944 = vadd.f32 %v1942, %v1943
        %v1945 = vsel %vm1231, %v1863, 0.0
        %v1946 = vrot.slane %v1945, 4
        %v1947 = vadd.f32 %v1945, %v1946
        %v1948 = vrot.slane %v1947, 2
        %v1949 = vadd.f32 %v1947, %v1948
        %v1950 = vrot.slane %v1949, 1
        %v1951 = vadd.f32 %v1949, %v1950
        %v1952 = vsel %vm1231, %v1864, 0.0
        %v1953 = vrot.slane %v1952, 4
        %v1954 = vadd.f32 %v1952, %v1953
        %v1955 = vrot.slane %v1954, 2
        %v1956 = vadd.f32 %v1954, %v1955
        %v1957 = vrot.slane %v1956, 1
        %v1958 = vadd.f32 %v1956, %v1957
        %v1959 = vsel %vm1231, %v1865, 0.0
        %v1960 = vrot.slane %v1959, 4
        %v1961 = vadd.f32 %v1959, %v1960
        %v1962 = vrot.slane %v1961, 2
        %v1963 = vadd.f32 %v1961, %v1962
        %v1964 = vrot.slane %v1963, 1
        %v1965 = vadd.f32 %v1963, %v1964
        %v1966 = vsel %vm1231, %v1866, 0.0
        %v1967 = vrot.slane %v1966, 4
        %v1968 = vadd.f32 %v1966, %v1967
        %v1969 = vrot.slane %v1968, 2
        %v1970 = vadd.f32 %v1968, %v1969
        %v1971 = vrot.slane %v1970, 1
        %v1972 = vadd.f32 %v1970, %v1971
        %v1973 = vsel %vm1231, %v1867, 0.0
        %v1974 = vrot.slane %v1973, 4
        %v1975 = vadd.f32 %v1973, %v1974
        %v1976 = vrot.slane %v1975, 2
        %v1977 = vadd.f32 %v1975, %v1976
        %v1978 = vrot.slane %v1977, 1
        %v1979 = vadd.f32 %v1977, %v1978
        %v1980 = vld [vmem:[%s10] sm:$0xff]
        %v1981 = vld [vmem:[%s10 + $0x8] sm:$0xff]
        %v1982 = vld [vmem:[%s10 + $0x10] sm:$0xff]
        %v1983 = vld [vmem:[%s10 + $0x18] sm:$0xff]
        %v1984 = vld [vmem:[%s10 + $0x20] sm:$0xff]
        %v1985 = vld [vmem:[%s10 + $0x28] sm:$0xff]
        %v1986 = vld [vmem:[%s10 + $0x30] sm:$0xff]
        %v1987 = vld [vmem:[%s10 + $0x38] sm:$0xff]
        %v1988 = vld [vmem:[%s10 + $0x40] sm:$0xff]
        %v1989 = vld [vmem:[%s10 + $0x48] sm:$0xff]
        %v1990 = vld [vmem:[%s10 + $0x50] sm:$0xff]
        %v1991 = vld [vmem:[%s10 + $0x58] sm:$0xff]
        %v1992 = vld [vmem:[%s10 + $0x60] sm:$0xff]
        %v1993 = vld [vmem:[%s10 + $0x68] sm:$0xff]
        %v1994 = vld [vmem:[%s10 + $0x70] sm:$0xff]
        %v1995 = vld [vmem:[%s10 + $0x78] sm:$0xff]
        %v1996 = vld [vmem:[%s11] sm:$0xff]
        %v1997 = vld [vmem:[%s11 + $0x8] sm:$0xff]
        %v1998 = vld [vmem:[%s11 + $0x10] sm:$0xff]
        %v1999 = vld [vmem:[%s11 + $0x18] sm:$0xff]
        %v2000 = vld [vmem:[%s11 + $0x20] sm:$0xff]
        %v2001 = vld [vmem:[%s11 + $0x28] sm:$0xff]
        %v2002 = vld [vmem:[%s11 + $0x30] sm:$0xff]
        %v2003 = vld [vmem:[%s11 + $0x38] sm:$0xff]
        %v2004 = vld [vmem:[%s11 + $0x40] sm:$0xff]
        %v2005 = vld [vmem:[%s11 + $0x48] sm:$0xff]
        %v2006 = vld [vmem:[%s11 + $0x50] sm:$0xff]
        %v2007 = vld [vmem:[%s11 + $0x58] sm:$0xff]
        %v2008 = vld [vmem:[%s11 + $0x60] sm:$0xff]
        %v2009 = vld [vmem:[%s11 + $0x68] sm:$0xff]
        %v2010 = vld [vmem:[%s11 + $0x70] sm:$0xff]
        %v2011 = vld [vmem:[%s11 + $0x78] sm:$0xff]
        %v2028 = vsel %vm1362, %v1881, %v1874
        %v2029 = vsel %vm1364, %v1888, %v2028
        %v2030 = vsel %vm1366, %v1895, %v2029
        %v2031 = vsel %vm1368, %v1902, %v2030
        %v2032 = vsel %vm1370, %v1909, %v2031
        %v2033 = vsel %vm1372, %v1916, %v2032
        %v2034 = vsel %vm1374, %v1923, %v2033
        %v2035 = vsel %vm1362, %v1937, %v1930
        %v2036 = vsel %vm1364, %v1944, %v2035
        %v2037 = vsel %vm1366, %v1951, %v2036
        %v2038 = vsel %vm1368, %v1958, %v2037
        %v2039 = vsel %vm1370, %v1965, %v2038
        %v2040 = vsel %vm1372, %v1972, %v2039
        %v2041 = vsel %vm1374, %v1979, %v2040
        %2044 = vmatprep.subr.mxu0 0.0
        %2045 = vmatpush1.msra.mxu0 %v1996
        %2046 = vmatprep.subr.mxu0 0.0
        %2047 = vmatpush1.msra.mxu0 %v1997
        %2048 = vmatprep.subr.mxu0 0.0
        %2049 = vmatpush1.msra.mxu0 %v1998
        %2050 = vmatprep.subr.mxu0 0.0
        %2051 = vmatpush1.msra.mxu0 %v1999
        %2052 = vmatprep.subr.mxu0 0.0
        %2053 = vmatpush1.msra.mxu0 %v2000
        %2054 = vmatprep.subr.mxu0 0.0
        %2055 = vmatpush1.msra.mxu0 %v2001
        %2056 = vmatprep.subr.mxu0 0.0
        %2057 = vmatpush1.msra.mxu0 %v2002
        %2058 = vmatprep.subr.mxu0 0.0
        %2059 = vmatpush1.msra.mxu0 %v2003
        %2060 = vmatprep.subr.mxu0 0.0
        %2061 = vmatpush1.msra.mxu0 %v2004
        %2062 = vmatprep.subr.mxu0 0.0
        %2063 = vmatpush1.msra.mxu0 %v2005
        %2064 = vmatprep.subr.mxu0 0.0
        %2065 = vmatpush1.msra.mxu0 %v2006
        %2066 = vmatprep.subr.mxu0 0.0
        %2067 = vmatpush1.msra.mxu0 %v2007
        %2068 = vmatprep.subr.mxu0 0.0
        %2069 = vmatpush1.msra.mxu0 %v2008
        %2070 = vmatprep.subr.mxu0 0.0
        %2071 = vmatpush1.msra.mxu0 %v2009
        %2072 = vmatprep.subr.mxu0 0.0
        %2073 = vmatpush1.msra.mxu0 %v2010
        %2074 = vmatprep.subr.mxu0 0.0
        %2075 = vmatpush1.msra.mxu0 %v2011
        %2076 = vmatprep.subr.mxu0 0.0
        %2077 = vmatpush1.msra.mxu0 0.0
        %2078 = vmatprep.subr.mxu0 0.0
        %2079 = vmatpush1.msra.mxu0 0.0
        %2080 = vmatprep.subr.mxu0 0.0
        %2081 = vmatpush1.msra.mxu0 0.0
        %2082 = vmatprep.subr.mxu0 0.0
        %2083 = vmatpush1.msra.mxu0 0.0
        %2084 = vmatprep.subr.mxu0 0.0
        %2085 = vmatpush1.msra.mxu0 0.0
        %2086 = vmatprep.subr.mxu0 0.0
        %2087 = vmatpush1.msra.mxu0 0.0
        %2088 = vmatprep.subr.mxu0 0.0
        %2089 = vmatpush1.msra.mxu0 0.0
        %2090 = vmatprep.subr.mxu0 0.0
        %2091 = vmatpush1.msra.mxu0 0.0
        %2092 = vmatprep.subr.mxu0 0.0
        %2093 = vmatpush1.msra.mxu0 0.0
        %2094 = vmatprep.subr.mxu0 0.0
        %2095 = vmatpush1.msra.mxu0 0.0
        %2096 = vmatprep.subr.mxu0 0.0
        %2097 = vmatpush1.msra.mxu0 0.0
        %2098 = vmatprep.subr.mxu0 0.0
        %2099 = vmatpush1.msra.mxu0 0.0
        %2100 = vmatprep.subr.mxu0 0.0
        %2101 = vmatpush1.msra.mxu0 0.0
        %2102 = vmatprep.subr.mxu0 0.0
        %2103 = vmatpush1.msra.mxu0 0.0
        %2104 = vmatprep.subr.mxu0 0.0
        %2105 = vmatpush1.msra.mxu0 0.0
        %2106 = vmatprep.subr.mxu0 0.0
        %2107 = vmatpush1.msra.mxu0 0.0
        %2108 = vmatprep.mubr.f32.mxu0 0.0
        %2109 = vmatmul.mubr.f32.gmra.mrb[0].mxu0 %v2034
        %v2110 = vpop.f32.mrb[0].mxu0
        %v2111 = vadd.f32 0.0, %v2110
        %v2112 = vpop.f32.mrb[0].mxu0
        %2113 = vmatprep.mubr.f32.mxu0 0.0
        %2114 = vmatmul.mubr.f32.gmra.mrb[0].mxu0 %v2041
        %v2115 = vpop.f32.mrb[0].mxu0
        %v2116 = vadd.f32 0.0, %v2115
        %v2117 = vpop.f32.mrb[0].mxu0
        %2118 = vdwg.mxu0
        %2119 = vmatprep.subr.mxu0 0.0
        %2120 = vmatpush1.msra.mxu0 %v1980
        %2121 = vmatprep.subr.mxu0 0.0
        %2122 = vmatpush1.msra.mxu0 %v1981
        %2123 = vmatprep.subr.mxu0 0.0
        %2124 = vmatpush1.msra.mxu0 %v1982
        %2125 = vmatprep.subr.mxu0 0.0
        %2126 = vmatpush1.msra.mxu0 %v1983
        %2127 = vmatprep.subr.mxu0 0.0
        %2128 = vmatpush1.msra.mxu0 %v1984
        %2129 = vmatprep.subr.mxu0 0.0
        %2130 = vmatpush1.msra.mxu0 %v1985
        %2131 = vmatprep.subr.mxu0 0.0
        %2132 = vmatpush1.msra.mxu0 %v1986
        %2133 = vmatprep.subr.mxu0 0.0
        %2134 = vmatpush1.msra.mxu0 %v1987
        %2135 = vmatprep.subr.mxu0 0.0
        %2136 = vmatpush1.msra.mxu0 %v1988
        %2137 = vmatprep.subr.mxu0 0.0
        %2138 = vmatpush1.msra.mxu0 %v1989
        %2139 = vmatprep.subr.mxu0 0.0
        %2140 = vmatpush1.msra.mxu0 %v1990
        %2141 = vmatprep.subr.mxu0 0.0
        %2142 = vmatpush1.msra.mxu0 %v1991
        %2143 = vmatprep.subr.mxu0 0.0
        %2144 = vmatpush1.msra.mxu0 %v1992
        %2145 = vmatprep.subr.mxu0 0.0
        %2146 = vmatpush1.msra.mxu0 %v1993
        %2147 = vmatprep.subr.mxu0 0.0
        %2148 = vmatpush1.msra.mxu0 %v1994
        %2149 = vmatprep.subr.mxu0 0.0
        %2150 = vmatpush1.msra.mxu0 %v1995
        %2151 = vmatprep.subr.mxu0 0.0
        %2152 = vmatpush1.msra.mxu0 0.0
        %2153 = vmatprep.subr.mxu0 0.0
        %2154 = vmatpush1.msra.mxu0 0.0
        %2155 = vmatprep.subr.mxu0 0.0
        %2156 = vmatpush1.msra.mxu0 0.0
        %2157 = vmatprep.subr.mxu0 0.0
        %2158 = vmatpush1.msra.mxu0 0.0
        %2159 = vmatprep.subr.mxu0 0.0
        %2160 = vmatpush1.msra.mxu0 0.0
        %2161 = vmatprep.subr.mxu0 0.0
        %2162 = vmatpush1.msra.mxu0 0.0
        %2163 = vmatprep.subr.mxu0 0.0
        %2164 = vmatpush1.msra.mxu0 0.0
        %2165 = vmatprep.subr.mxu0 0.0
        %2166 = vmatpush1.msra.mxu0 0.0
        %2167 = vmatprep.subr.mxu0 0.0
        %2168 = vmatpush1.msra.mxu0 0.0
        %2169 = vmatprep.subr.mxu0 0.0
        %2170 = vmatpush1.msra.mxu0 0.0
        %2171 = vmatprep.subr.mxu0 0.0
        %2172 = vmatpush1.msra.mxu0 0.0
        %2173 = vmatprep.subr.mxu0 0.0
        %2174 = vmatpush1.msra.mxu0 0.0
        %2175 = vmatprep.subr.mxu0 0.0
        %2176 = vmatpush1.msra.mxu0 0.0
        %2177 = vmatprep.subr.mxu0 0.0
        %2178 = vmatpush1.msra.mxu0 0.0
        %2179 = vmatprep.subr.mxu0 0.0
        %2180 = vmatpush1.msra.mxu0 0.0
        %2181 = vmatprep.subr.mxu0 0.0
        %2182 = vmatpush1.msra.mxu0 0.0
        %2183 = vmatprep.mubr.f32.mxu0 0.0
        %2184 = vmatmul.mubr.f32.gmra.mrb[0].mxu0 %v692
        %v2185 = vpop.f32.mrb[0].mxu0
        %v2186 = vadd.f32 %v2111, %v2185
        %v2187 = vpop.f32.mrb[0].mxu0
        %2188 = vmatprep.mubr.f32.mxu0 0.0
        %2189 = vmatmul.mubr.f32.gmra.mrb[0].mxu0 %v693
        %v2190 = vpop.f32.mrb[0].mxu0
        %v2191 = vadd.f32 %v2116, %v2190
        %v2192 = vpop.f32.mrb[0].mxu0
        %2193 = vdwg.mxu0
        %v2194 = vld [vmem:[%s12] sm:$0x1]
        %v2196 = vlaneseq
        %v2197 = vshrl.u32 %v2196, 7
        %v2198 = vsub.s32 0, %v2197
        %v2199 = vrot.slane %v2194, %v2198
        %v2201 = vadd.f32 %v2186, %v2199
        %v2202 = vadd.f32 %v2191, %v2199
        %vm2203 = vcmp.gt.f32.partialorder %v2201, 0.0
        %vm2204 = vcmp.gt.f32.partialorder %v2202, 0.0
        %v2205 = vmul.f32 %v2201, 0.01
        %v2206 = vmul.f32 %v2202, 0.01
        %v2207 = vsel %vm2203, %v2201, %v2205
        %v2208 = vsel %vm2204, %v2202, %v2206
        %2209 = vst [vmem:[%s482] sm:$0xff] %v2207
        %2210 = vst [vmem:[%s482 + $0x8] sm:$0xff] %v2208
        %s2211 = sand.u32 %s328, 1
        %s2212 = scalar_lea.sflag [#allocation3], %s2211
        %s2213 = sand.u32 %s328, 1
        %s2214 = smul.addr %s2213, 16
        %s2215 = scalar_lea.vmem [#allocation2], %s2214
        // Predicated region
        $region73: #{tpu_custom_call.1} parent=71 // pred_check
          %p2216 = pneg %p338
        $region74: #{tpu_custom_call.1} parent=71 // pred_check_branch
          %2218 = sbr.rel (%p2216) target = $region76
        $region75: #{tpu_custom_call.1} parent=71 // pred_region
          %s2219 = smul.u32 2, %s27
          %s2221 = ssub.s32 256, 256
          %2222 = vsyncadd %s2212, %s2221
          %s2223 = smul.addr %s2219, 128
          %s2224 = scalar_lea.hbm %s13, %s2223
          %s2225 = sshll.u32 %s2215, 4
          %s2226 = int_to_ptr.vmem [resolvable:$true] %s2225
          %2231 = dma.vmem_to_hbm [thread:$0]  %s2226, 256, %s2224, %s2212, 128, 128, 8
        $region76: #{tpu_custom_call.1} parent=71 // pred_fallthru
          _
      $region72: #{tpu_custom_call.1} parent=5 // pred_fallthru
        _
      %p2232 = scmp.le.s32.totalorder 2, %s22
      // Predicated region
      $region77: #{tpu_custom_call.1} parent=5 // pred_check
        %p2233 = pneg %p2232
      $region78: #{tpu_custom_call.1} parent=5 // pred_check_branch
        %2235 = sbr.rel (%p2233) target = $region80
      $region79: #{tpu_custom_call.1} parent=5 // pred_region
        %s2236 = ssub.s32 %s22, 2
        // Predicated region
        $region81: #{tpu_custom_call.1} parent=79 // pred_check
          %p2237 = pneg %p344
        $region82: #{tpu_custom_call.1} parent=79 // pred_check_branch
          %2239 = sbr.rel (%p2237) target = $region84
        $region83: #{tpu_custom_call.1} parent=79 // pred_region
          %s2240 = sand.u32 %s329, 1
          %s2241 = scalar_lea.sflag [#allocation3], %s2240
          %s2242 = sand.u32 %s329, 1
          %s2243 = smul.addr %s2242, 16
          %s2244 = scalar_lea.vmem [#allocation2], %s2243
          %2245 = dma.done %s2241, 256
        $region84: #{tpu_custom_call.1} parent=79 // pred_fallthru
          _
      $region80: #{tpu_custom_call.1} parent=5 // pred_fallthru
        _
    $region6: #{tpu_custom_call.1} parent=1 // loop_footer
      %s26 = sadd.s32 1, %s22
    $region7: #{tpu_custom_call.1} parent=1 // loop_footer_branch
      %21 = sbr.rel target = $region3
    $region8: #{tpu_custom_call.1} parent=1 // loop_exit
      _
    %2246 = vsyncpa [#allocation3], 1
    %s2247 = scalar_lea.sflag [#allocation3], 1
    %2248 = vsyncpa %s2247, 1

</llo_original>
